<compile_context>
chip_gen: v6e
topology: v6e:2x2x1
jax: 0.10.0
libtpu: 0.0.40
codegen_flags: <defaults>
</compile_context>

<pallas_src>
import math
import functools

import jax
import jax.numpy as jnp
from jax.experimental import pallas as pl
from jax.experimental.pallas import tpu as pltpu


# ----------------------------- kernel helpers -----------------------------
def _layer_norm(x, gamma, beta, eps=1e-5):
    mu = jnp.mean(x, axis=-1, keepdims=True)
    xc = x - mu
    var = jnp.mean(xc * xc, axis=-1, keepdims=True)
    return xc * jax.lax.rsqrt(var + eps) * gamma + beta


# ------------------------------- the kernel -------------------------------
def attention_scad_kernel(
    # packed inputs (12 operands instead of 28)
    x_ref, sw_ref, ln_in_ref, w_emb_ref, b_emb_ref,
    w_qkv_ref, b_qkv_ref, w_o_ref, w_ffn_ref, enc_vec_ref,
    w_fc_ref, b_fc_ref,
    # output
    out_ref,
    # scratch: activations carried across encoder grid steps
    act_ref,
    *, head_num, mm_dtype, approx_recip,
):
    e = pl.program_id(0)

    def mm(a, w):
        # matmul operands in mm_dtype (bf16 on MXU), f32 accumulation
        return jnp.dot(a.astype(mm_dtype), w.astype(mm_dtype),
                       preferred_element_type=jnp.float32)

    def mm_nt(a, b):
        # a (M,K) @ b(N,K)^T without an explicit transpose
        return jax.lax.dot_general(
            a.astype(mm_dtype), b.astype(mm_dtype),
            dimension_numbers=(((1,), (1,)), ((), ())),
            preferred_element_type=jnp.float32)

    # ---- embeddings (only on the first grid step) ----
    @pl.when(e == 0)
    def _embed():
        x = x_ref[...].astype(jnp.float32)
        sw = sw_ref[...].astype(jnp.float32)
        h = _layer_norm(x, ln_in_ref[0:1, :], ln_in_ref[1:2, :])
        s = _layer_norm(sw, ln_in_ref[2:3, :], ln_in_ref[3:4, :])
        # scad_trainable=True path: sum of the two embeddings
        act_ref[...] = (mm(h, w_emb_ref[0, :, :]) + b_emb_ref[0:1, :]
                        + mm(s, w_emb_ref[1, :, :]) + b_emb_ref[1:2, :])

    out = act_ref[...]
    B, H = out.shape
    dh = H // head_num
    scale = 1.0 / math.sqrt(dh)

    # ---- fused Q/K/V projection: one MXU pass instead of three ----
    qkv = mm(out, w_qkv_ref[0, :, :]) + b_qkv_ref[0, :, :]          # (B, 3H)
    q = qkv[:, 0 * H:1 * H] * scale                                 # scale folded once
    k = qkv[:, 1 * H:2 * H]
    v = qkv[:, 2 * H:3 * H]

    # ---- multi-head attention: statically unrolled tiny per-head matmuls ----
    heads = []
    for hh in range(head_num):
        sl = slice(hh * dh, (hh + 1) * dh)
        s_qk = mm_nt(q[:, sl], k[:, sl])                            # (B, B) f32
        s_qk = s_qk - jnp.max(s_qk, axis=-1, keepdims=True)
        p = jnp.exp(s_qk)
        denom = jnp.sum(p, axis=-1, keepdims=True)
        p = p * pl.reciprocal(denom, approx=approx_recip)
        heads.append(mm(p, v[:, sl]))                               # (B, dh)
    attn = jnp.concatenate(heads, axis=-1)                          # (B, H)

    attn = mm(attn, w_o_ref[0, :, :]) + enc_vec_ref[0, 0:1, :]      # output proj + bo
    # TODO(synk): dropout (p=0.3) is an inference-mode identity here.
    out = _layer_norm(out + attn, enc_vec_ref[0, 1:2, :], enc_vec_ref[0, 2:3, :])

    # ---- position-wise feed-forward ----
    ff = jnp.maximum(mm(out, w_ffn_ref[0, 0, :, :]) + enc_vec_ref[0, 3:4, :], 0.0)
    ff = mm(ff, w_ffn_ref[0, 1, :, :]) + enc_vec_ref[0, 4:5, :]
    out = _layer_norm(out + ff, enc_vec_ref[0, 5:6, :], enc_vec_ref[0, 6:7, :])

    act_ref[...] = out

    # ---- final fc on the last grid step (lane-dense padded output) ----
    @pl.when(e == pl.num_programs(0) - 1)
    def _final():
        out_ref[...] = (mm(out, w_fc_ref[...]) + b_fc_ref[...]).astype(out_ref.dtype)


# ---------------------------- parameter packing -----------------------------
def _pack_params(p, out_pad):
    """Consolidate the 28 small parameter tensors into 10 packed arrays."""
    H = p["wfe"].shape[1]
    O = p["wfc"].shape[1]
    f32 = jnp.float32

    ln_in = jnp.stack([p["lnf_g"].reshape(-1), p["lnf_b"].reshape(-1),
                       p["lnp_g"].reshape(-1), p["lnp_b"].reshape(-1)], axis=0)
    w_emb = jnp.stack([p["wfe"], p["wpe"]], axis=0)                       # (2, Din, H)
    b_emb = jnp.stack([p["bfe"].reshape(-1), p["bpe"].reshape(-1)], axis=0)
    w_qkv = jnp.concatenate([p["wq"], p["wk"], p["wv"]], axis=-1)         # (E, H, 3H)
    b_qkv = jnp.concatenate([p["bq"], p["bk"], p["bv"]], axis=-1)[:, None, :]  # (E,1,3H)
    w_o = p["wo"]                                                         # (E, H, H)
    w_ffn = jnp.stack([p["w1"], p["w2"]], axis=1)                         # (E, 2, H, H)
    enc_vec = jnp.stack([p["bo"], p["ln1g"], p["ln1b"], p["b1"], p["b2"],
                         p["ln2g"], p["ln2b"]], axis=1)                   # (E, 7, H)
    w_fc = jnp.zeros((H, out_pad), f32).at[:, :O].set(p["wfc"])
    b_fc = jnp.zeros((1, out_pad), f32).at[:, :O].set(p["bfc"].reshape(1, -1))
    return ln_in, w_emb, b_emb, w_qkv, b_qkv, w_o, w_ffn, enc_vec, w_fc, b_fc


# ------------------------------- wrapper -----------------------------------
def attention_scad_forward(x, scad_weight, params, *, num_encoder, head_num,
                           mm_dtype=jnp.bfloat16):
    B, Din = x.shape
    H = params["wfe"].shape[1]
    O = params["wfc"].shape[1]
    assert H % head_num == 0
    Opad = ((O + 127) // 128) * 128          # lane-dense output (unmasked stores)

    packed = _pack_params(params, Opad)

    grid_spec = pltpu.PrefetchScalarGridSpec(
        num_scalar_prefetch=0,
        grid=(num_encoder,),
        in_specs=[
            # constant across the encoder axis -> DMA'd once, kept resident
            pl.BlockSpec((B, Din), lambda e: (0, 0)),            # x
            pl.BlockSpec((B, Din), lambda e: (0, 0)),            # scad_weight
            pl.BlockSpec((4, Din), lambda e: (0, 0)),            # ln_in
            pl.BlockSpec((2, Din, H), lambda e: (0, 0, 0)),      # w_emb
            pl.BlockSpec((2, H), lambda e: (0, 0)),              # b_emb
            # per-encoder weights, streamed (double-buffered prefetch)
            pl.BlockSpec((1, H, 3 * H), lambda e: (e, 0, 0)),    # w_qkv
            pl.BlockSpec((1, 1, 3 * H), lambda e: (e, 0, 0)),    # b_qkv
            pl.BlockSpec((1, H, H), lambda e: (e, 0, 0)),        # w_o
            pl.BlockSpec((1, 2, H, H), lambda e: (e, 0, 0, 0)),  # w_ffn (w1, w2)
            pl.BlockSpec((1, 7, H), lambda e: (e, 0, 0)),        # enc_vec (biases/LN)
            # final fc (constant)
            pl.BlockSpec((H, Opad), lambda e: (0, 0)),           # w_fc (padded)
            pl.BlockSpec((1, Opad), lambda e: (0, 0)),           # b_fc (padded)
        ],
        out_specs=pl.BlockSpec((B, Opad), lambda e: (0, 0)),
        scratch_shapes=[pltpu.VMEM((B, H), jnp.float32)],        # carried activations
    )

    kernel = functools.partial(
        attention_scad_kernel,
        head_num=head_num,
        mm_dtype=mm_dtype,
        approx_recip=(mm_dtype == jnp.bfloat16),
    )
    out = pl.pallas_call(
        kernel,
        out_shape=jax.ShapeDtypeStruct((B, Opad), jnp.float32),
        grid_spec=grid_spec,
        compiler_params=pltpu.CompilerParams(
            dimension_semantics=("arbitrary",),      # carried state across encoders
            vmem_limit_bytes=32 * 1024 * 1024,
        ),
    )(x, scad_weight, *packed)
    return out[:, :O]


# -------------------------- pure-JAX reference ------------------------------
def attention_scad_reference(x, sw, p, *, num_encoder, head_num):
    h = _layer_norm(x, p["lnf_g"], p["lnf_b"])
    s = _layer_norm(sw, p["lnp_g"], p["lnp_b"])
    out = (h @ p["wfe"] + p["bfe"]) + (s @ p["wpe"] + p["bpe"])
    hidden = out.shape[-1]
    dh = hidden // head_num
    scale = 1.0 / math.sqrt(dh)
    for e in range(num_encoder):
        q = out @ p["wq"][e] + p["bq"][e]
        k = out @ p["wk"][e] + p["bk"][e]
        v = out @ p["wv"][e] + p["bv"][e]
        heads = []
        for hh in range(head_num):
            sl = slice(hh * dh, (hh + 1) * dh)
            sc = (q[:, sl] @ k[:, sl].T) * scale
            pr = jax.nn.softmax(sc, axis=-1)
            heads.append(pr @ v[:, sl])
        attn = jnp.concatenate(heads, axis=-1) @ p["wo"][e] + p["bo"][e]
        out = _layer_norm(out + attn, p["ln1g"][e], p["ln1b"][e])
        ff = jnp.maximum(out @ p["w1"][e] + p["b1"][e], 0.0)
        ff = ff @ p["w2"][e] + p["b2"][e]
        out = _layer_norm(out + ff, p["ln2g"][e], p["ln2b"][e])
    return out @ p["wfc"] + p["bfc"]


# ------------------------------ param init ----------------------------------
def init_params(key, input_dim, hidden_dim, output_dim, num_encoder):
    ks = jax.random.split(key, 16)

    def w(k, shape, scale=0.05):
        return (scale * jax.random.normal(k, shape)).astype(jnp.float32)

    p = {
        "lnf_g": jnp.ones((1, input_dim), jnp.float32),
        "lnf_b": jnp.zeros((1, input_dim), jnp.float32),
        "lnp_g": jnp.ones((1, input_dim), jnp.float32),
        "lnp_b": jnp.zeros((1, input_dim), jnp.float32),
        "wfe": w(ks[0], (input_dim, hidden_dim)),
        "bfe": w(ks[1], (1, hidden_dim)),
        "wpe": w(ks[2], (input_dim, hidden_dim)),
        "bpe": w(ks[3], (1, hidden_dim)),
        "wq": w(ks[4], (num_encoder, hidden_dim, hidden_dim)),
        "bq": jnp.zeros((num_encoder, hidden_dim), jnp.float32),
        "wk": w(ks[5], (num_encoder, hidden_dim, hidden_dim)),
        "bk": jnp.zeros((num_encoder, hidden_dim), jnp.float32),
        "wv": w(ks[6], (num_encoder, hidden_dim, hidden_dim)),
        "bv": jnp.zeros((num_encoder, hidden_dim), jnp.float32),
        "wo": w(ks[7], (num_encoder, hidden_dim, hidden_dim)),
        "bo": jnp.zeros((num_encoder, hidden_dim), jnp.float32),
        "ln1g": jnp.ones((num_encoder, hidden_dim), jnp.float32),
        "ln1b": jnp.zeros((num_encoder, hidden_dim), jnp.float32),
        "w1": w(ks[8], (num_encoder, hidden_dim, hidden_dim)),
        "b1": w(ks[9], (num_encoder, hidden_dim)),
        "w2": w(ks[10], (num_encoder, hidden_dim, hidden_dim)),
        "b2": w(ks[11], (num_encoder, hidden_dim)),
        "ln2g": jnp.ones((num_encoder, hidden_dim), jnp.float32),
        "ln2b": jnp.zeros((num_encoder, hidden_dim), jnp.float32),
        "wfc": w(ks[12], (hidden_dim, output_dim)),
        "bfc": w(ks[13], (1, output_dim)),
    }
    return p


# ---------------------------------- main -------------------------------------
if __name__ == "__main__":
    B, INPUT_DIM, HIDDEN_DIM, OUTPUT_DIM = 8, 16, 32, 4
    HEAD_NUM, NUM_ENCODER = 4, 2

    key = jax.random.PRNGKey(0)
    kx, ksw, kp = jax.random.split(key, 3)
    x = jax.random.normal(kx, (B, INPUT_DIM), jnp.float32)
    scad_weight = jax.random.normal(ksw, (B, INPUT_DIM), jnp.float32)
    params = init_params(kp, INPUT_DIM, HIDDEN_DIM, OUTPUT_DIM, NUM_ENCODER)

    # optimized path: bf16 matmul operands (f32 accumulation, f32 elementwise)
    out_bf16 = attention_scad_forward(
        x, scad_weight, params, num_encoder=NUM_ENCODER, head_num=HEAD_NUM,
        mm_dtype=jnp.bfloat16)
    out_bf16 = jax.block_until_ready(out_bf16)

    # full-f32 path (exact reciprocal) for a tight correctness check
    out_f32 = attention_scad_forward(
        x, scad_weight, params, num_encoder=NUM_ENCODER, head_num=HEAD_NUM,
        mm_dtype=jnp.float32)
    out_f32 = jax.block_until_ready(out_f32)

    ref = attention_scad_reference(
        x, scad_weight, params, num_encoder=NUM_ENCODER, head_num=HEAD_NUM)

    assert out_bf16.shape == (B, OUTPUT_DIM)
    assert out_f32.shape == (B, OUTPUT_DIM)
    assert jnp.allclose(out_f32, ref, rtol=5e-3, atol=5e-3), "f32 mismatch vs reference"
    assert jnp.allclose(out_bf16, ref, rtol=5e-2, atol=5e-2), "bf16 mismatch vs reference"

    print("KERNEL_OK")
</pallas_src>

<mosaic_0001>
module attributes {stable_mosaic.version = 11 : i64} {
  func.func @attention_scad_kernel(%arg0: i32, %arg1: memref<8x16xf32, #tpu.memory_space<vmem>>, %arg2: memref<8x16xf32, #tpu.memory_space<vmem>>, %arg3: memref<4x16xf32, #tpu.memory_space<vmem>>, %arg4: memref<2x16x32xf32, #tpu.memory_space<vmem>>, %arg5: memref<2x32xf32, #tpu.memory_space<vmem>>, %arg6: memref<1x32x96xf32, #tpu.memory_space<vmem>>, %arg7: memref<1x1x96xf32, #tpu.memory_space<vmem>>, %arg8: memref<1x32x32xf32, #tpu.memory_space<vmem>>, %arg9: memref<1x2x32x32xf32, #tpu.memory_space<vmem>>, %arg10: memref<1x7x32xf32, #tpu.memory_space<vmem>>, %arg11: memref<32x128xf32, #tpu.memory_space<vmem>>, %arg12: memref<1x128xf32, #tpu.memory_space<vmem>>, %arg13: memref<8x128xf32, #tpu.memory_space<vmem>>, %arg14: memref<8x32xf32, #tpu.memory_space<vmem>>) attributes {dimension_semantics = [#tpu.dimension_semantics<arbitrary>], iteration_bounds = array<i64: 2>, scalar_prefetch = 0 : i64, scratch_operands = 1 : i64, tpu.core_type = #tpu.core_type<tc>, window_params = [{pipeline_mode = #tpu.pipeline_mode<synchronous>, transform_indices = @transform_0, window_bounds = array<i64: 8, 16>}, {pipeline_mode = #tpu.pipeline_mode<synchronous>, transform_indices = @transform_1, window_bounds = array<i64: 8, 16>}, {pipeline_mode = #tpu.pipeline_mode<synchronous>, transform_indices = @transform_2, window_bounds = array<i64: 4, 16>}, {pipeline_mode = #tpu.pipeline_mode<synchronous>, transform_indices = @transform_3, window_bounds = array<i64: 2, 16, 32>}, {pipeline_mode = #tpu.pipeline_mode<synchronous>, transform_indices = @transform_4, window_bounds = array<i64: 2, 32>}, {transform_indices = @transform_5, window_bounds = array<i64: 1, 32, 96>}, {transform_indices = @transform_6, window_bounds = array<i64: 1, 1, 96>}, {transform_indices = @transform_7, window_bounds = array<i64: 1, 32, 32>}, {transform_indices = @transform_8, window_bounds = array<i64: 1, 2, 32, 32>}, {transform_indices = @transform_9, window_bounds = array<i64: 1, 7, 32>}, {pipeline_mode = #tpu.pipeline_mode<synchronous>, transform_indices = @transform_10, window_bounds = array<i64: 32, 128>}, {pipeline_mode = #tpu.pipeline_mode<synchronous>, transform_indices = @transform_11, window_bounds = array<i64: 1, 128>}, {pipeline_mode = #tpu.pipeline_mode<synchronous>, transform_indices = @transform_12, window_bounds = array<i64: 8, 128>}]} {
    %c0_i32 = arith.constant 0 : i32
    %0 = arith.cmpi eq, %arg0, %c0_i32 : i32
    %1 = arith.extui %0 : i1 to i32
    %c0_i32_0 = arith.constant 0 : i32
    %2 = arith.cmpi ne, %1, %c0_i32_0 : i32
    scf.if %2 {
      %c0_68 = arith.constant 0 : index
      %c0_69 = arith.constant 0 : index
      %178 = vector.load %arg1[%c0_68, %c0_69] : memref<8x16xf32, #tpu.memory_space<vmem>>, vector<8x16xf32>
      %c0_70 = arith.constant 0 : index
      %c0_71 = arith.constant 0 : index
      %179 = vector.load %arg2[%c0_70, %c0_71] : memref<8x16xf32, #tpu.memory_space<vmem>>, vector<8x16xf32>
      %c0_72 = arith.constant 0 : index
      %c0_73 = arith.constant 0 : index
      %180 = vector.load %arg3[%c0_72, %c0_73] : memref<4x16xf32, #tpu.memory_space<vmem>>, vector<1x16xf32>
      %c1_74 = arith.constant 1 : index
      %c0_75 = arith.constant 0 : index
      %181 = vector.load %arg3[%c1_74, %c0_75] : memref<4x16xf32, #tpu.memory_space<vmem>>, vector<1x16xf32>
      %cst_76 = arith.constant dense<0.000000e+00> : vector<8xf32>
      %182 = vector.multi_reduction <add>, %178, %cst_76 [1] : vector<8x16xf32> to vector<8xf32>
      %183 = vector.shape_cast %182 : vector<8xf32> to vector<8x1xf32>
      %cst_77 = arith.constant 1.600000e+01 : f32
      %184 = vector.broadcast %cst_77 : f32 to vector<8x1xf32>
      %185 = arith.divf %183, %184 : vector<8x1xf32>
      %186 = vector.broadcast %185 : vector<8x1xf32> to vector<8x16xf32>
      %187 = arith.subf %178, %186 : vector<8x16xf32>
      %188 = arith.mulf %187, %187 : vector<8x16xf32>
      %cst_78 = arith.constant dense<0.000000e+00> : vector<8xf32>
      %189 = vector.multi_reduction <add>, %188, %cst_78 [1] : vector<8x16xf32> to vector<8xf32>
      %190 = vector.shape_cast %189 : vector<8xf32> to vector<8x1xf32>
      %cst_79 = arith.constant 1.600000e+01 : f32
      %191 = vector.broadcast %cst_79 : f32 to vector<8x1xf32>
      %192 = arith.divf %190, %191 : vector<8x1xf32>
      %cst_80 = arith.constant 9.99999974E-6 : f32
      %193 = vector.broadcast %cst_80 : f32 to vector<8x1xf32>
      %194 = arith.addf %192, %193 : vector<8x1xf32>
      %195 = math.rsqrt %194 : vector<8x1xf32>
      %196 = vector.broadcast %195 : vector<8x1xf32> to vector<8x16xf32>
      %197 = arith.mulf %187, %196 : vector<8x16xf32>
      %198 = vector.broadcast %180 : vector<1x16xf32> to vector<8x16xf32>
      %199 = arith.mulf %197, %198 : vector<8x16xf32>
      %200 = vector.broadcast %181 : vector<1x16xf32> to vector<8x16xf32>
      %201 = arith.addf %199, %200 : vector<8x16xf32>
      %c2_81 = arith.constant 2 : index
      %c0_82 = arith.constant 0 : index
      %202 = vector.load %arg3[%c2_81, %c0_82] : memref<4x16xf32, #tpu.memory_space<vmem>>, vector<1x16xf32>
      %c3_83 = arith.constant 3 : index
      %c0_84 = arith.constant 0 : index
      %203 = vector.load %arg3[%c3_83, %c0_84] : memref<4x16xf32, #tpu.memory_space<vmem>>, vector<1x16xf32>
      %cst_85 = arith.constant dense<0.000000e+00> : vector<8xf32>
      %204 = vector.multi_reduction <add>, %179, %cst_85 [1] : vector<8x16xf32> to vector<8xf32>
      %205 = vector.shape_cast %204 : vector<8xf32> to vector<8x1xf32>
      %cst_86 = arith.constant 1.600000e+01 : f32
      %206 = vector.broadcast %cst_86 : f32 to vector<8x1xf32>
      %207 = arith.divf %205, %206 : vector<8x1xf32>
      %208 = vector.broadcast %207 : vector<8x1xf32> to vector<8x16xf32>
      %209 = arith.subf %179, %208 : vector<8x16xf32>
      %210 = arith.mulf %209, %209 : vector<8x16xf32>
      %cst_87 = arith.constant dense<0.000000e+00> : vector<8xf32>
      %211 = vector.multi_reduction <add>, %210, %cst_87 [1] : vector<8x16xf32> to vector<8xf32>
      %212 = vector.shape_cast %211 : vector<8xf32> to vector<8x1xf32>
      %cst_88 = arith.constant 1.600000e+01 : f32
      %213 = vector.broadcast %cst_88 : f32 to vector<8x1xf32>
      %214 = arith.divf %212, %213 : vector<8x1xf32>
      %cst_89 = arith.constant 9.99999974E-6 : f32
      %215 = vector.broadcast %cst_89 : f32 to vector<8x1xf32>
      %216 = arith.addf %214, %215 : vector<8x1xf32>
      %217 = math.rsqrt %216 : vector<8x1xf32>
      %218 = vector.broadcast %217 : vector<8x1xf32> to vector<8x16xf32>
      %219 = arith.mulf %209, %218 : vector<8x16xf32>
      %220 = vector.broadcast %202 : vector<1x16xf32> to vector<8x16xf32>
      %221 = arith.mulf %219, %220 : vector<8x16xf32>
      %222 = vector.broadcast %203 : vector<1x16xf32> to vector<8x16xf32>
      %223 = arith.addf %221, %222 : vector<8x16xf32>
      %c0_90 = arith.constant 0 : index
      %c0_91 = arith.constant 0 : index
      %c0_92 = arith.constant 0 : index
      %224 = vector.load %arg4[%c0_90, %c0_91, %c0_92] : memref<2x16x32xf32, #tpu.memory_space<vmem>>, vector<1x16x32xf32>
      %225 = vector.shape_cast %224 : vector<1x16x32xf32> to vector<16x32xf32>
      %226 = arith.truncf %201 : vector<8x16xf32> to vector<8x16xbf16>
      %227 = arith.truncf %225 : vector<16x32xf32> to vector<16x32xbf16>
      %cst_93 = arith.constant dense<0.000000e+00> : vector<8x32xf32>
      %228 = tpu.matmul %226, %227, %cst_93 {dimension_numbers = #tpu.dot_dimension_numbers<[1], [0], [0], [1], [0, 0, 1, 1], [], []>} : vector<8x16xbf16>, vector<16x32xbf16>, vector<8x32xf32> -> vector<8x32xf32>
      %c0_94 = arith.constant 0 : index
      %c0_95 = arith.constant 0 : index
      %229 = vector.load %arg5[%c0_94, %c0_95] : memref<2x32xf32, #tpu.memory_space<vmem>>, vector<1x32xf32>
      %230 = vector.broadcast %229 : vector<1x32xf32> to vector<8x32xf32>
      %231 = arith.addf %228, %230 : vector<8x32xf32>
      %c1_96 = arith.constant 1 : index
      %c0_97 = arith.constant 0 : index
      %c0_98 = arith.constant 0 : index
      %232 = vector.load %arg4[%c1_96, %c0_97, %c0_98] : memref<2x16x32xf32, #tpu.memory_space<vmem>>, vector<1x16x32xf32>
      %233 = vector.shape_cast %232 : vector<1x16x32xf32> to vector<16x32xf32>
      %234 = arith.truncf %223 : vector<8x16xf32> to vector<8x16xbf16>
      %235 = arith.truncf %233 : vector<16x32xf32> to vector<16x32xbf16>
      %cst_99 = arith.constant dense<0.000000e+00> : vector<8x32xf32>
      %236 = tpu.matmul %234, %235, %cst_99 {dimension_numbers = #tpu.dot_dimension_numbers<[1], [0], [0], [1], [0, 0, 1, 1], [], []>} : vector<8x16xbf16>, vector<16x32xbf16>, vector<8x32xf32> -> vector<8x32xf32>
      %237 = arith.addf %231, %236 : vector<8x32xf32>
      %c1_100 = arith.constant 1 : index
      %c0_101 = arith.constant 0 : index
      %238 = vector.load %arg5[%c1_100, %c0_101] : memref<2x32xf32, #tpu.memory_space<vmem>>, vector<1x32xf32>
      %239 = vector.broadcast %238 : vector<1x32xf32> to vector<8x32xf32>
      %240 = arith.addf %237, %239 : vector<8x32xf32>
      %c0_102 = arith.constant 0 : index
      %c0_103 = arith.constant 0 : index
      %241 = vector.load %arg14[%c0_102, %c0_103] : memref<8x32xf32, #tpu.memory_space<vmem>>, vector<8x32xf32>
      tpu.vector_store %arg14[%c0_102, %c0_103], %240 {strides = array<i32>} : memref<8x32xf32, #tpu.memory_space<vmem>>, vector<8x32xf32>,
    } else {
    }
    %c0 = arith.constant 0 : index
    %c0_1 = arith.constant 0 : index
    %3 = vector.load %arg14[%c0, %c0_1] : memref<8x32xf32, #tpu.memory_space<vmem>>, vector<8x32xf32>
    %c0_2 = arith.constant 0 : index
    %c0_3 = arith.constant 0 : index
    %c0_4 = arith.constant 0 : index
    %4 = vector.load %arg6[%c0_2, %c0_3, %c0_4] : memref<1x32x96xf32, #tpu.memory_space<vmem>>, vector<1x32x96xf32>
    %5 = vector.shape_cast %4 : vector<1x32x96xf32> to vector<32x96xf32>
    %6 = arith.truncf %3 : vector<8x32xf32> to vector<8x32xbf16>
    %7 = arith.truncf %5 : vector<32x96xf32> to vector<32x96xbf16>
    %cst = arith.constant dense<0.000000e+00> : vector<8x96xf32>
    %8 = tpu.matmul %6, %7, %cst {dimension_numbers = #tpu.dot_dimension_numbers<[1], [0], [0], [1], [0, 0, 1, 1], [], []>} : vector<8x32xbf16>, vector<32x96xbf16>, vector<8x96xf32> -> vector<8x96xf32>
    %c0_5 = arith.constant 0 : index
    %c0_6 = arith.constant 0 : index
    %c0_7 = arith.constant 0 : index
    %9 = vector.load %arg7[%c0_5, %c0_6, %c0_7] : memref<1x1x96xf32, #tpu.memory_space<vmem>>, vector<1x1x96xf32>
    %10 = vector.shape_cast %9 : vector<1x1x96xf32> to vector<1x96xf32>
    %11 = vector.broadcast %10 : vector<1x96xf32> to vector<8x96xf32>
    %12 = arith.addf %8, %11 : vector<8x96xf32>
    %13 = vector.extract_strided_slice %12 {offsets = [0, 0], sizes = [8, 32], strides = [1, 1]} : vector<8x96xf32> to vector<8x32xf32>
    %cst_8 = arith.constant 0.353553385 : f32
    %14 = vector.broadcast %cst_8 : f32 to vector<8x32xf32>
    %15 = arith.mulf %13, %14 : vector<8x32xf32>
    %16 = vector.extract_strided_slice %12 {offsets = [0, 32], sizes = [8, 32], strides = [1, 1]} : vector<8x96xf32> to vector<8x32xf32>
    %17 = vector.extract_strided_slice %12 {offsets = [0, 64], sizes = [8, 32], strides = [1, 1]} : vector<8x96xf32> to vector<8x32xf32>
    %18 = vector.extract_strided_slice %15 {offsets = [0, 0], sizes = [8, 8], strides = [1, 1]} : vector<8x32xf32> to vector<8x8xf32>
    %19 = vector.extract_strided_slice %16 {offsets = [0, 0], sizes = [8, 8], strides = [1, 1]} : vector<8x32xf32> to vector<8x8xf32>
    %20 = arith.truncf %18 : vector<8x8xf32> to vector<8x8xbf16>
    %21 = arith.truncf %19 : vector<8x8xf32> to vector<8x8xbf16>
    %cst_9 = arith.constant dense<0.000000e+00> : vector<8x8xf32>
    %22 = tpu.matmul %20, %21, %cst_9 {dimension_numbers = #tpu.dot_dimension_numbers<[1], [1], [0], [0], [0, 0, 1, 0], [], []>} : vector<8x8xbf16>, vector<8x8xbf16>, vector<8x8xf32> -> vector<8x8xf32>
    %cst_10 = arith.constant dense<0xFF800000> : vector<8xf32>
    %23 = vector.multi_reduction <maximumf>, %22, %cst_10 [1] : vector<8x8xf32> to vector<8xf32>
    %24 = vector.shape_cast %23 : vector<8xf32> to vector<8x1xf32>
    %25 = vector.broadcast %24 : vector<8x1xf32> to vector<8x8xf32>
    %26 = arith.subf %22, %25 : vector<8x8xf32>
    %27 = math.exp %26 : vector<8x8xf32>
    %cst_11 = arith.constant dense<0.000000e+00> : vector<8xf32>
    %28 = vector.multi_reduction <add>, %27, %cst_11 [1] : vector<8x8xf32> to vector<8xf32>
    %29 = vector.shape_cast %28 : vector<8xf32> to vector<8x1xf32>
    %30 = tpu.reciprocal %29 {approx = true} : vector<8x1xf32> -> vector<8x1xf32>
    %31 = vector.broadcast %30 : vector<8x1xf32> to vector<8x8xf32>
    %32 = arith.mulf %27, %31 : vector<8x8xf32>
    %33 = vector.extract_strided_slice %17 {offsets = [0, 0], sizes = [8, 8], strides = [1, 1]} : vector<8x32xf32> to vector<8x8xf32>
    %34 = arith.truncf %32 : vector<8x8xf32> to vector<8x8xbf16>
    %35 = arith.truncf %33 : vector<8x8xf32> to vector<8x8xbf16>
    %cst_12 = arith.constant dense<0.000000e+00> : vector<8x8xf32>
    %36 = tpu.matmul %34, %35, %cst_12 {dimension_numbers = #tpu.dot_dimension_numbers<[1], [0], [0], [1], [0, 0, 1, 1], [], []>} : vector<8x8xbf16>, vector<8x8xbf16>, vector<8x8xf32> -> vector<8x8xf32>
    %37 = vector.extract_strided_slice %15 {offsets = [0, 8], sizes = [8, 8], strides = [1, 1]} : vector<8x32xf32> to vector<8x8xf32>
    %38 = vector.extract_strided_slice %16 {offsets = [0, 8], sizes = [8, 8], strides = [1, 1]} : vector<8x32xf32> to vector<8x8xf32>
    %39 = arith.truncf %37 : vector<8x8xf32> to vector<8x8xbf16>
    %40 = arith.truncf %38 : vector<8x8xf32> to vector<8x8xbf16>
    %cst_13 = arith.constant dense<0.000000e+00> : vector<8x8xf32>
    %41 = tpu.matmul %39, %40, %cst_13 {dimension_numbers = #tpu.dot_dimension_numbers<[1], [1], [0], [0], [0, 0, 1, 0], [], []>} : vector<8x8xbf16>, vector<8x8xbf16>, vector<8x8xf32> -> vector<8x8xf32>
    %cst_14 = arith.constant dense<0xFF800000> : vector<8xf32>
    %42 = vector.multi_reduction <maximumf>, %41, %cst_14 [1] : vector<8x8xf32> to vector<8xf32>
    %43 = vector.shape_cast %42 : vector<8xf32> to vector<8x1xf32>
    %44 = vector.broadcast %43 : vector<8x1xf32> to vector<8x8xf32>
    %45 = arith.subf %41, %44 : vector<8x8xf32>
    %46 = math.exp %45 : vector<8x8xf32>
    %cst_15 = arith.constant dense<0.000000e+00> : vector<8xf32>
    %47 = vector.multi_reduction <add>, %46, %cst_15 [1] : vector<8x8xf32> to vector<8xf32>
    %48 = vector.shape_cast %47 : vector<8xf32> to vector<8x1xf32>
    %49 = tpu.reciprocal %48 {approx = true} : vector<8x1xf32> -> vector<8x1xf32>
    %50 = vector.broadcast %49 : vector<8x1xf32> to vector<8x8xf32>
    %51 = arith.mulf %46, %50 : vector<8x8xf32>
    %52 = vector.extract_strided_slice %17 {offsets = [0, 8], sizes = [8, 8], strides = [1, 1]} : vector<8x32xf32> to vector<8x8xf32>
    %53 = arith.truncf %51 : vector<8x8xf32> to vector<8x8xbf16>
    %54 = arith.truncf %52 : vector<8x8xf32> to vector<8x8xbf16>
    %cst_16 = arith.constant dense<0.000000e+00> : vector<8x8xf32>
    %55 = tpu.matmul %53, %54, %cst_16 {dimension_numbers = #tpu.dot_dimension_numbers<[1], [0], [0], [1], [0, 0, 1, 1], [], []>} : vector<8x8xbf16>, vector<8x8xbf16>, vector<8x8xf32> -> vector<8x8xf32>
    %56 = vector.extract_strided_slice %15 {offsets = [0, 16], sizes = [8, 8], strides = [1, 1]} : vector<8x32xf32> to vector<8x8xf32>
    %57 = vector.extract_strided_slice %16 {offsets = [0, 16], sizes = [8, 8], strides = [1, 1]} : vector<8x32xf32> to vector<8x8xf32>
    %58 = arith.truncf %56 : vector<8x8xf32> to vector<8x8xbf16>
    %59 = arith.truncf %57 : vector<8x8xf32> to vector<8x8xbf16>
    %cst_17 = arith.constant dense<0.000000e+00> : vector<8x8xf32>
    %60 = tpu.matmul %58, %59, %cst_17 {dimension_numbers = #tpu.dot_dimension_numbers<[1], [1], [0], [0], [0, 0, 1, 0], [], []>} : vector<8x8xbf16>, vector<8x8xbf16>, vector<8x8xf32> -> vector<8x8xf32>
    %cst_18 = arith.constant dense<0xFF800000> : vector<8xf32>
    %61 = vector.multi_reduction <maximumf>, %60, %cst_18 [1] : vector<8x8xf32> to vector<8xf32>
    %62 = vector.shape_cast %61 : vector<8xf32> to vector<8x1xf32>
    %63 = vector.broadcast %62 : vector<8x1xf32> to vector<8x8xf32>
    %64 = arith.subf %60, %63 : vector<8x8xf32>
    %65 = math.exp %64 : vector<8x8xf32>
    %cst_19 = arith.constant dense<0.000000e+00> : vector<8xf32>
    %66 = vector.multi_reduction <add>, %65, %cst_19 [1] : vector<8x8xf32> to vector<8xf32>
    %67 = vector.shape_cast %66 : vector<8xf32> to vector<8x1xf32>
    %68 = tpu.reciprocal %67 {approx = true} : vector<8x1xf32> -> vector<8x1xf32>
    %69 = vector.broadcast %68 : vector<8x1xf32> to vector<8x8xf32>
    %70 = arith.mulf %65, %69 : vector<8x8xf32>
    %71 = vector.extract_strided_slice %17 {offsets = [0, 16], sizes = [8, 8], strides = [1, 1]} : vector<8x32xf32> to vector<8x8xf32>
    %72 = arith.truncf %70 : vector<8x8xf32> to vector<8x8xbf16>
    %73 = arith.truncf %71 : vector<8x8xf32> to vector<8x8xbf16>
    %cst_20 = arith.constant dense<0.000000e+00> : vector<8x8xf32>
    %74 = tpu.matmul %72, %73, %cst_20 {dimension_numbers = #tpu.dot_dimension_numbers<[1], [0], [0], [1], [0, 0, 1, 1], [], []>} : vector<8x8xbf16>, vector<8x8xbf16>, vector<8x8xf32> -> vector<8x8xf32>
    %75 = vector.extract_strided_slice %15 {offsets = [0, 24], sizes = [8, 8], strides = [1, 1]} : vector<8x32xf32> to vector<8x8xf32>
    %76 = vector.extract_strided_slice %16 {offsets = [0, 24], sizes = [8, 8], strides = [1, 1]} : vector<8x32xf32> to vector<8x8xf32>
    %77 = arith.truncf %75 : vector<8x8xf32> to vector<8x8xbf16>
    %78 = arith.truncf %76 : vector<8x8xf32> to vector<8x8xbf16>
    %cst_21 = arith.constant dense<0.000000e+00> : vector<8x8xf32>
    %79 = tpu.matmul %77, %78, %cst_21 {dimension_numbers = #tpu.dot_dimension_numbers<[1], [1], [0], [0], [0, 0, 1, 0], [], []>} : vector<8x8xbf16>, vector<8x8xbf16>, vector<8x8xf32> -> vector<8x8xf32>
    %cst_22 = arith.constant dense<0xFF800000> : vector<8xf32>
    %80 = vector.multi_reduction <maximumf>, %79, %cst_22 [1] : vector<8x8xf32> to vector<8xf32>
    %81 = vector.shape_cast %80 : vector<8xf32> to vector<8x1xf32>
    %82 = vector.broadcast %81 : vector<8x1xf32> to vector<8x8xf32>
    %83 = arith.subf %79, %82 : vector<8x8xf32>
    %84 = math.exp %83 : vector<8x8xf32>
    %cst_23 = arith.constant dense<0.000000e+00> : vector<8xf32>
    %85 = vector.multi_reduction <add>, %84, %cst_23 [1] : vector<8x8xf32> to vector<8xf32>
    %86 = vector.shape_cast %85 : vector<8xf32> to vector<8x1xf32>
    %87 = tpu.reciprocal %86 {approx = true} : vector<8x1xf32> -> vector<8x1xf32>
    %88 = vector.broadcast %87 : vector<8x1xf32> to vector<8x8xf32>
    %89 = arith.mulf %84, %88 : vector<8x8xf32>
    %90 = vector.extract_strided_slice %17 {offsets = [0, 24], sizes = [8, 8], strides = [1, 1]} : vector<8x32xf32> to vector<8x8xf32>
    %91 = arith.truncf %89 : vector<8x8xf32> to vector<8x8xbf16>
    %92 = arith.truncf %90 : vector<8x8xf32> to vector<8x8xbf16>
    %cst_24 = arith.constant dense<0.000000e+00> : vector<8x8xf32>
    %93 = tpu.matmul %91, %92, %cst_24 {dimension_numbers = #tpu.dot_dimension_numbers<[1], [0], [0], [1], [0, 0, 1, 1], [], []>} : vector<8x8xbf16>, vector<8x8xbf16>, vector<8x8xf32> -> vector<8x8xf32>
    %94 = tpu.concatenate %36, %55, %74, %93 in 1 : vector<8x8xf32>, vector<8x8xf32>, vector<8x8xf32>, vector<8x8xf32> -> vector<8x32xf32>
    %c0_25 = arith.constant 0 : index
    %c0_26 = arith.constant 0 : index
    %c0_27 = arith.constant 0 : index
    %95 = vector.load %arg8[%c0_25, %c0_26, %c0_27] : memref<1x32x32xf32, #tpu.memory_space<vmem>>, vector<1x32x32xf32>
    %96 = vector.shape_cast %95 : vector<1x32x32xf32> to vector<32x32xf32>
    %97 = arith.truncf %94 : vector<8x32xf32> to vector<8x32xbf16>
    %98 = arith.truncf %96 : vector<32x32xf32> to vector<32x32xbf16>
    %cst_28 = arith.constant dense<0.000000e+00> : vector<8x32xf32>
    %99 = tpu.matmul %97, %98, %cst_28 {dimension_numbers = #tpu.dot_dimension_numbers<[1], [0], [0], [1], [0, 0, 1, 1], [], []>} : vector<8x32xbf16>, vector<32x32xbf16>, vector<8x32xf32> -> vector<8x32xf32>
    %c0_29 = arith.constant 0 : index
    %c0_30 = arith.constant 0 : index
    %c0_31 = arith.constant 0 : index
    %100 = vector.load %arg10[%c0_29, %c0_30, %c0_31] : memref<1x7x32xf32, #tpu.memory_space<vmem>>, vector<1x1x32xf32>
    %101 = vector.shape_cast %100 : vector<1x1x32xf32> to vector<1x32xf32>
    %102 = vector.broadcast %101 : vector<1x32xf32> to vector<8x32xf32>
    %103 = arith.addf %99, %102 : vector<8x32xf32>
    %104 = arith.addf %3, %103 : vector<8x32xf32>
    %c0_32 = arith.constant 0 : index
    %c1 = arith.constant 1 : index
    %c0_33 = arith.constant 0 : index
    %105 = vector.load %arg10[%c0_32, %c1, %c0_33] : memref<1x7x32xf32, #tpu.memory_space<vmem>>, vector<1x1x32xf32>
    %106 = vector.shape_cast %105 : vector<1x1x32xf32> to vector<1x32xf32>
    %c0_34 = arith.constant 0 : index
    %c2 = arith.constant 2 : index
    %c0_35 = arith.constant 0 : index
    %107 = vector.load %arg10[%c0_34, %c2, %c0_35] : memref<1x7x32xf32, #tpu.memory_space<vmem>>, vector<1x1x32xf32>
    %108 = vector.shape_cast %107 : vector<1x1x32xf32> to vector<1x32xf32>
    %cst_36 = arith.constant dense<0.000000e+00> : vector<8xf32>
    %109 = vector.multi_reduction <add>, %104, %cst_36 [1] : vector<8x32xf32> to vector<8xf32>
    %110 = vector.shape_cast %109 : vector<8xf32> to vector<8x1xf32>
    %cst_37 = arith.constant 3.200000e+01 : f32
    %111 = vector.broadcast %cst_37 : f32 to vector<8x1xf32>
    %112 = arith.divf %110, %111 : vector<8x1xf32>
    %113 = vector.broadcast %112 : vector<8x1xf32> to vector<8x32xf32>
    %114 = arith.subf %104, %113 : vector<8x32xf32>
    %115 = arith.mulf %114, %114 : vector<8x32xf32>
    %cst_38 = arith.constant dense<0.000000e+00> : vector<8xf32>
    %116 = vector.multi_reduction <add>, %115, %cst_38 [1] : vector<8x32xf32> to vector<8xf32>
    %117 = vector.shape_cast %116 : vector<8xf32> to vector<8x1xf32>
    %cst_39 = arith.constant 3.200000e+01 : f32
    %118 = vector.broadcast %cst_39 : f32 to vector<8x1xf32>
    %119 = arith.divf %117, %118 : vector<8x1xf32>
    %cst_40 = arith.constant 9.99999974E-6 : f32
    %120 = vector.broadcast %cst_40 : f32 to vector<8x1xf32>
    %121 = arith.addf %119, %120 : vector<8x1xf32>
    %122 = math.rsqrt %121 : vector<8x1xf32>
    %123 = vector.broadcast %122 : vector<8x1xf32> to vector<8x32xf32>
    %124 = arith.mulf %114, %123 : vector<8x32xf32>
    %125 = vector.broadcast %106 : vector<1x32xf32> to vector<8x32xf32>
    %126 = arith.mulf %124, %125 : vector<8x32xf32>
    %127 = vector.broadcast %108 : vector<1x32xf32> to vector<8x32xf32>
    %128 = arith.addf %126, %127 : vector<8x32xf32>
    %c0_41 = arith.constant 0 : index
    %c0_42 = arith.constant 0 : index
    %c0_43 = arith.constant 0 : index
    %c0_44 = arith.constant 0 : index
    %129 = vector.load %arg9[%c0_41, %c0_42, %c0_43, %c0_44] : memref<1x2x32x32xf32, #tpu.memory_space<vmem>>, vector<1x1x32x32xf32>
    %130 = vector.shape_cast %129 : vector<1x1x32x32xf32> to vector<32x32xf32>
    %131 = arith.truncf %128 : vector<8x32xf32> to vector<8x32xbf16>
    %132 = arith.truncf %130 : vector<32x32xf32> to vector<32x32xbf16>
    %cst_45 = arith.constant dense<0.000000e+00> : vector<8x32xf32>
    %133 = tpu.matmul %131, %132, %cst_45 {dimension_numbers = #tpu.dot_dimension_numbers<[1], [0], [0], [1], [0, 0, 1, 1], [], []>} : vector<8x32xbf16>, vector<32x32xbf16>, vector<8x32xf32> -> vector<8x32xf32>
    %c0_46 = arith.constant 0 : index
    %c3 = arith.constant 3 : index
    %c0_47 = arith.constant 0 : index
    %134 = vector.load %arg10[%c0_46, %c3, %c0_47] : memref<1x7x32xf32, #tpu.memory_space<vmem>>, vector<1x1x32xf32>
    %135 = vector.shape_cast %134 : vector<1x1x32xf32> to vector<1x32xf32>
    %136 = vector.broadcast %135 : vector<1x32xf32> to vector<8x32xf32>
    %137 = arith.addf %133, %136 : vector<8x32xf32>
    %cst_48 = arith.constant 0.000000e+00 : f32
    %138 = vector.broadcast %cst_48 : f32 to vector<8x32xf32>
    %139 = arith.maximumf %137, %138 : vector<8x32xf32>
    %c0_49 = arith.constant 0 : index
    %c1_50 = arith.constant 1 : index
    %c0_51 = arith.constant 0 : index
    %c0_52 = arith.constant 0 : index
    %140 = vector.load %arg9[%c0_49, %c1_50, %c0_51, %c0_52] : memref<1x2x32x32xf32, #tpu.memory_space<vmem>>, vector<1x1x32x32xf32>
    %141 = vector.shape_cast %140 : vector<1x1x32x32xf32> to vector<32x32xf32>
    %142 = arith.truncf %139 : vector<8x32xf32> to vector<8x32xbf16>
    %143 = arith.truncf %141 : vector<32x32xf32> to vector<32x32xbf16>
    %cst_53 = arith.constant dense<0.000000e+00> : vector<8x32xf32>
    %144 = tpu.matmul %142, %143, %cst_53 {dimension_numbers = #tpu.dot_dimension_numbers<[1], [0], [0], [1], [0, 0, 1, 1], [], []>} : vector<8x32xbf16>, vector<32x32xbf16>, vector<8x32xf32> -> vector<8x32xf32>
    %c0_54 = arith.constant 0 : index
    %c4 = arith.constant 4 : index
    %c0_55 = arith.constant 0 : index
    %145 = vector.load %arg10[%c0_54, %c4, %c0_55] : memref<1x7x32xf32, #tpu.memory_space<vmem>>, vector<1x1x32xf32>
    %146 = vector.shape_cast %145 : vector<1x1x32xf32> to vector<1x32xf32>
    %147 = vector.broadcast %146 : vector<1x32xf32> to vector<8x32xf32>
    %148 = arith.addf %144, %147 : vector<8x32xf32>
    %149 = arith.addf %128, %148 : vector<8x32xf32>
    %c0_56 = arith.constant 0 : index
    %c5 = arith.constant 5 : index
    %c0_57 = arith.constant 0 : index
    %150 = vector.load %arg10[%c0_56, %c5, %c0_57] : memref<1x7x32xf32, #tpu.memory_space<vmem>>, vector<1x1x32xf32>
    %151 = vector.shape_cast %150 : vector<1x1x32xf32> to vector<1x32xf32>
    %c0_58 = arith.constant 0 : index
    %c6 = arith.constant 6 : index
    %c0_59 = arith.constant 0 : index
    %152 = vector.load %arg10[%c0_58, %c6, %c0_59] : memref<1x7x32xf32, #tpu.memory_space<vmem>>, vector<1x1x32xf32>
    %153 = vector.shape_cast %152 : vector<1x1x32xf32> to vector<1x32xf32>
    %cst_60 = arith.constant dense<0.000000e+00> : vector<8xf32>
    %154 = vector.multi_reduction <add>, %149, %cst_60 [1] : vector<8x32xf32> to vector<8xf32>
    %155 = vector.shape_cast %154 : vector<8xf32> to vector<8x1xf32>
    %cst_61 = arith.constant 3.200000e+01 : f32
    %156 = vector.broadcast %cst_61 : f32 to vector<8x1xf32>
    %157 = arith.divf %155, %156 : vector<8x1xf32>
    %158 = vector.broadcast %157 : vector<8x1xf32> to vector<8x32xf32>
    %159 = arith.subf %149, %158 : vector<8x32xf32>
    %160 = arith.mulf %159, %159 : vector<8x32xf32>
    %cst_62 = arith.constant dense<0.000000e+00> : vector<8xf32>
    %161 = vector.multi_reduction <add>, %160, %cst_62 [1] : vector<8x32xf32> to vector<8xf32>
    %162 = vector.shape_cast %161 : vector<8xf32> to vector<8x1xf32>
    %cst_63 = arith.constant 3.200000e+01 : f32
    %163 = vector.broadcast %cst_63 : f32 to vector<8x1xf32>
    %164 = arith.divf %162, %163 : vector<8x1xf32>
    %cst_64 = arith.constant 9.99999974E-6 : f32
    %165 = vector.broadcast %cst_64 : f32 to vector<8x1xf32>
    %166 = arith.addf %164, %165 : vector<8x1xf32>
    %167 = math.rsqrt %166 : vector<8x1xf32>
    %168 = vector.broadcast %167 : vector<8x1xf32> to vector<8x32xf32>
    %169 = arith.mulf %159, %168 : vector<8x32xf32>
    %170 = vector.broadcast %151 : vector<1x32xf32> to vector<8x32xf32>
    %171 = arith.mulf %169, %170 : vector<8x32xf32>
    %172 = vector.broadcast %153 : vector<1x32xf32> to vector<8x32xf32>
    %173 = arith.addf %171, %172 : vector<8x32xf32>
    %c0_65 = arith.constant 0 : index
    %c0_66 = arith.constant 0 : index
    %174 = vector.load %arg14[%c0_65, %c0_66] : memref<8x32xf32, #tpu.memory_space<vmem>>, vector<8x32xf32>
    tpu.vector_store %arg14[%c0_65, %c0_66], %173 {strides = array<i32>} : memref<8x32xf32, #tpu.memory_space<vmem>>, vector<8x32xf32>,
    %c1_i32 = arith.constant 1 : i32
    %175 = arith.cmpi eq, %arg0, %c1_i32 : i32
    %176 = arith.extui %175 : i1 to i32
    %c0_i32_67 = arith.constant 0 : i32
    %177 = arith.cmpi ne, %176, %c0_i32_67 : i32
    scf.if %177 {
      %c0_68 = arith.constant 0 : index
      %c0_69 = arith.constant 0 : index
      %178 = vector.load %arg11[%c0_68, %c0_69] : memref<32x128xf32, #tpu.memory_space<vmem>>, vector<32x128xf32>
      %179 = arith.truncf %173 : vector<8x32xf32> to vector<8x32xbf16>
      %180 = arith.truncf %178 : vector<32x128xf32> to vector<32x128xbf16>
      %cst_70 = arith.constant dense<0.000000e+00> : vector<8x128xf32>
      %181 = tpu.matmul %179, %180, %cst_70 {dimension_numbers = #tpu.dot_dimension_numbers<[1], [0], [0], [1], [0, 0, 1, 1], [], []>} : vector<8x32xbf16>, vector<32x128xbf16>, vector<8x128xf32> -> vector<8x128xf32>
      %c0_71 = arith.constant 0 : index
      %c0_72 = arith.constant 0 : index
      %182 = vector.load %arg12[%c0_71, %c0_72] : memref<1x128xf32, #tpu.memory_space<vmem>>, vector<1x128xf32>
      %183 = vector.broadcast %182 : vector<1x128xf32> to vector<8x128xf32>
      %184 = arith.addf %181, %183 : vector<8x128xf32>
      %c0_73 = arith.constant 0 : index
      %c0_74 = arith.constant 0 : index
      %185 = vector.load %arg13[%c0_73, %c0_74] : memref<8x128xf32, #tpu.memory_space<vmem>>, vector<8x128xf32>
      tpu.vector_store %arg13[%c0_73, %c0_74], %184 {strides = array<i32>} : memref<8x128xf32, #tpu.memory_space<vmem>>, vector<8x128xf32>,
    } else {
    }
    return
  }
  func.func @transform_0(%arg0: i32) -> (i32, i32) {
    %c0_i32 = arith.constant 0 : i32
    %c0_i32_0 = arith.constant 0 : i32
    %c0_i32_1 = arith.constant 0 : i32
    return %c0_i32, %c0_i32_0 : i32, i32
  }
  func.func @transform_1(%arg0: i32) -> (i32, i32) {
    %c0_i32 = arith.constant 0 : i32
    %c0_i32_0 = arith.constant 0 : i32
    %c0_i32_1 = arith.constant 0 : i32
    return %c0_i32, %c0_i32_0 : i32, i32
  }
  func.func @transform_2(%arg0: i32) -> (i32, i32) {
    %c0_i32 = arith.constant 0 : i32
    %c0_i32_0 = arith.constant 0 : i32
    %c0_i32_1 = arith.constant 0 : i32
    return %c0_i32, %c0_i32_0 : i32, i32
  }
  func.func @transform_3(%arg0: i32) -> (i32, i32, i32) {
    %c0_i32 = arith.constant 0 : i32
    %c0_i32_0 = arith.constant 0 : i32
    %c0_i32_1 = arith.constant 0 : i32
    %c0_i32_2 = arith.constant 0 : i32
    return %c0_i32, %c0_i32_0, %c0_i32_1 : i32, i32, i32
  }
  func.func @transform_4(%arg0: i32) -> (i32, i32) {
    %c0_i32 = arith.constant 0 : i32
    %c0_i32_0 = arith.constant 0 : i32
    %c0_i32_1 = arith.constant 0 : i32
    return %c0_i32, %c0_i32_0 : i32, i32
  }
  func.func @transform_5(%arg0: i32) -> (i32, i32, i32) {
    %c0_i32 = arith.constant 0 : i32
    %c0_i32_0 = arith.constant 0 : i32
    %c0_i32_1 = arith.constant 0 : i32
    return %arg0, %c0_i32, %c0_i32_0 : i32, i32, i32
  }
  func.func @transform_6(%arg0: i32) -> (i32, i32, i32) {
    %c0_i32 = arith.constant 0 : i32
    %c0_i32_0 = arith.constant 0 : i32
    %c0_i32_1 = arith.constant 0 : i32
    return %arg0, %c0_i32, %c0_i32_0 : i32, i32, i32
  }
  func.func @transform_7(%arg0: i32) -> (i32, i32, i32) {
    %c0_i32 = arith.constant 0 : i32
    %c0_i32_0 = arith.constant 0 : i32
    %c0_i32_1 = arith.constant 0 : i32
    return %arg0, %c0_i32, %c0_i32_0 : i32, i32, i32
  }
  func.func @transform_8(%arg0: i32) -> (i32, i32, i32, i32) {
    %c0_i32 = arith.constant 0 : i32
    %c0_i32_0 = arith.constant 0 : i32
    %c0_i32_1 = arith.constant 0 : i32
    %c0_i32_2 = arith.constant 0 : i32
    return %arg0, %c0_i32, %c0_i32_0, %c0_i32_1 : i32, i32, i32, i32
  }
  func.func @transform_9(%arg0: i32) -> (i32, i32, i32) {
    %c0_i32 = arith.constant 0 : i32
    %c0_i32_0 = arith.constant 0 : i32
    %c0_i32_1 = arith.constant 0 : i32
    return %arg0, %c0_i32, %c0_i32_0 : i32, i32, i32
  }
  func.func @transform_10(%arg0: i32) -> (i32, i32) {
    %c0_i32 = arith.constant 0 : i32
    %c0_i32_0 = arith.constant 0 : i32
    %c0_i32_1 = arith.constant 0 : i32
    return %c0_i32, %c0_i32_0 : i32, i32
  }
  func.func @transform_11(%arg0: i32) -> (i32, i32) {
    %c0_i32 = arith.constant 0 : i32
    %c0_i32_0 = arith.constant 0 : i32
    %c0_i32_1 = arith.constant 0 : i32
    return %c0_i32, %c0_i32_0 : i32, i32
  }
  func.func @transform_12(%arg0: i32) -> (i32, i32) {
    %c0_i32 = arith.constant 0 : i32
    %c0_i32_0 = arith.constant 0 : i32
    %c0_i32_1 = arith.constant 0 : i32
    return %c0_i32, %c0_i32_0 : i32, i32
  }
}

</mosaic_0001>

<llo_original>
// kernel: tpu_custom_call.1
$region0: #{tpu_custom_call.1}
  #allocation0 [shape = 'u32[]', space=smem, size = 0x4, offset = 0x4, fixed_abs, tag = 'smem constant byte address 0x4 - core index']
  #allocation1 [shape = 'u32[144,128]{1,0:T(1,128)}', space=vmem, size = 0x12000, scoped, tag = 'internal scratch']
  #allocation2 [shape = 'f32[8,32]{1,0:T(8,128)}', space=vmem, size = 0x1000, scoped, tag = 'scratch operand']
  %s0 = inlined_call_operand.hbm [shape: f32[8,16], index: 0, kind: input, shape index: {}]
  %s1 = inlined_call_operand.hbm [shape: f32[8,16], index: 1, kind: input, shape index: {}]
  %s2 = inlined_call_operand.hbm [shape: f32[4,16], index: 2, kind: input, shape index: {}]
  %s3 = inlined_call_operand.vmem [shape: f32[2,16,32], index: 3, kind: input, shape index: {}]
  %s4 = inlined_call_operand.hbm [shape: f32[2,32], index: 4, kind: input, shape index: {}]
  %s5 = inlined_call_operand.hbm [shape: f32[2,32,96], index: 5, kind: input, shape index: {}]
  %s6 = inlined_call_operand.hbm [shape: f32[2,1,96], index: 6, kind: input, shape index: {}]
  %s7 = inlined_call_operand.hbm [shape: f32[2,32,32], index: 7, kind: input, shape index: {}]
  %s8 = inlined_call_operand.hbm [shape: f32[2,2,32,32], index: 8, kind: input, shape index: {}]
  %s9 = inlined_call_operand.vmem [shape: f32[2,7,32], index: 9, kind: input, shape index: {}]
  %s10 = inlined_call_operand.hbm [shape: f32[32,128], index: 10, kind: input, shape index: {}]
  %s11 = inlined_call_operand.vmem [shape: f32[1,128], index: 11, kind: input, shape index: {}]
  %s12 = inlined_call_operand.hbm [shape: f32[8,128], index: 12, kind: output, shape index: {}]
  %s13 = sld [smem:[#allocation0]]
  $region125: #{tpu_custom_call.1} parent=0
    _
  %s15 = ssub.s32 1, %s13
  %s16 = scalar_select 0, %s15, %s13
  $region1: #{tpu_custom_call.1} parent=0
    #allocation3 [shape = 'u8[4096]{0}', space=vmem, size = 0x1000, scoped, tag = 'input window, operand 0, single buffered']
    #allocation4 [shape = 's32[2]{0}', space=sflag, size = 0x8, scoped, tag = 'scoped memory for tpu_custom_call.1']
    #allocation5 [shape = 's32[2]{0}', space=sflag, size = 0x8, scoped, tag = 'scoped memory for tpu_custom_call.1']
    #allocation6 [shape = 'u8[4096]{0}', space=vmem, size = 0x1000, scoped, tag = 'input window, operand 1, single buffered']
    #allocation7 [shape = 's32[1]{0}', space=sflag, size = 0x4, scoped, tag = 'scoped memory for tpu_custom_call.1']
    #allocation8 [shape = 'u8[2048]{0}', space=vmem, size = 0x800, scoped, tag = 'input window, operand 2, single buffered']
    #allocation9 [shape = 'u8[1024]{0}', space=vmem, size = 0x400, scoped, tag = 'input window, operand 4, single buffered']
    #allocation10 [shape = 's32[1]{0}', space=sflag, size = 0x4, scoped, tag = 'scoped memory for tpu_custom_call.1']
    #allocation11 [shape = 'u8[32768]{0}', space=vmem, size = 0x8000, scoped, tag = 'input window, operand 5']
    #allocation12 [shape = 'u8[1024]{0}', space=vmem, size = 0x400, scoped, tag = 'input window, operand 6']
    #allocation13 [shape = 'u8[32768]{0}', space=vmem, size = 0x8000, scoped, tag = 'input window, operand 7']
    #allocation14 [shape = 'u8[65536]{0}', space=vmem, size = 0x10000, scoped, tag = 'input window, operand 8']
    #allocation15 [shape = 'u8[16384]{0}', space=vmem, size = 0x4000, scoped, tag = 'input window, operand 10, single buffered']
    #allocation16 [shape = 'u8[4096]{0}', space=vmem, size = 0x1000, scoped, tag = 'output window, operand 0, single buffered']
    %17 = vsyncpa [#allocation4], 0
    %18 = vsyncpa [#allocation7], 0
    %19 = vsyncpa [#allocation10], 0
    %20 = vsyncpa [#allocation5], 0
    loop: start=0, step=1, limit=4
    $region2: #{tpu_custom_call.1} parent=1 // loop_pre_header
      _
    $region3: #{tpu_custom_call.1} parent=1 // loop_header
      %s22 = sphi 0, %s26
      %p23 = scmp.ge.s32.totalorder %s22, 4
      %s30 = sphi 0, %s30
      %s32 = sphi 0, %s30
      %s33 = sphi 0, %s32
      %s47 = sphi 0, %s33
      %s51 = sphi 0, %s51
      %s53 = sphi 0, %s51
      %s54 = sphi 0, %s53
      %s68 = sphi 0, %s54
      %s72 = sphi 0, %s72
      %s74 = sphi 0, %s72
      %s75 = sphi 0, %s74
      %s89 = sphi 0, %s75
      %s93 = sphi 0, %s93
      %s95 = sphi 0, %s93
      %s96 = sphi 0, %s95
      %s110 = sphi 0, %s96
      %s114 = sphi 0, %s114
      %s116 = sphi 0, %s114
      %s117 = sphi 0, %s116
      %s131 = sphi 0, %s117
      %s137 = sphi 0, %s139
      %s140 = sphi 0, %s137
      %s141 = sphi 0, %s140
      %s157 = sphi 0, %s141
      %s163 = sphi 0, %s165
      %s166 = sphi 0, %s163
      %s167 = sphi 0, %s166
      %s183 = sphi 0, %s167
      %s189 = sphi 0, %s191
      %s192 = sphi 0, %s189
      %s193 = sphi 0, %s192
      %s209 = sphi 0, %s193
      %s215 = sphi 0, %s217
      %s218 = sphi 0, %s215
      %s219 = sphi 0, %s218
      %s235 = sphi 0, %s219
      %s241 = sphi 0, %s243
      %s244 = sphi 0, %s241
      %s245 = sphi 0, %s244
      %s261 = sphi 0, %s245
      %s265 = sphi 0, %s265
      %s267 = sphi 0, %s265
      %s268 = sphi 0, %s267
      %s282 = sphi 0, %s268
      %s286 = sphi 0, %s286
      %s288 = sphi 0, %s286
      %s289 = sphi 0, %s288
      %s303 = sphi 0, %s289
      %s307 = sphi 0, %s307
      %s309 = sphi 0, %s307
      %s310 = sphi 0, %s309
      %s324 = sphi 0, %s310
    $region4: #{tpu_custom_call.1} parent=1 // loop_header_branch
      %25 = sbr.rel (%p23) target = $region8
    $region5: #{tpu_custom_call.1} parent=1 // loop_body
      %s27 = ssub.s32 %s22, 1
      %s28 = ssub.s32 %s22, 2
      %s29 = sadd.s32 %s22, 1
      %s31 = sadd.s32 %s30, 1
      %p34 = scmp.eq.s32.totalorder %s22, 1
      %p35 = scmp.ne.s32.totalorder %s30, %s32
      %p36 = scmp.eq.s32.totalorder %s22, 0
      %p37 = por %p35, %p36
      %p38 = scmp.ne.s32.totalorder %s30, %s32
      %p39 = scmp.eq.s32.totalorder %s27, 1
      %p40 = por %p38, %p39
      %p41 = scmp.ne.s32.totalorder %s32, %s33
      %p42 = scmp.eq.s32.totalorder %s27, 0
      %p43 = por %p41, %p42
      %p44 = scmp.ne.s32.totalorder %s32, %s33
      %p45 = scmp.eq.s32.totalorder %s28, 1
      %p46 = por %p44, %p45
      %p48 = scmp.ne.s32.totalorder %s33, %s47
      %p49 = scmp.eq.s32.totalorder %s28, 0
      %p50 = por %p48, %p49
      %s52 = sadd.s32 %s51, 1
      %p55 = scmp.eq.s32.totalorder %s22, 1
      %p56 = scmp.ne.s32.totalorder %s51, %s53
      %p57 = scmp.eq.s32.totalorder %s22, 0
      %p58 = por %p56, %p57
      %p59 = scmp.ne.s32.totalorder %s51, %s53
      %p60 = scmp.eq.s32.totalorder %s27, 1
      %p61 = por %p59, %p60
      %p62 = scmp.ne.s32.totalorder %s53, %s54
      %p63 = scmp.eq.s32.totalorder %s27, 0
      %p64 = por %p62, %p63
      %p65 = scmp.ne.s32.totalorder %s53, %s54
      %p66 = scmp.eq.s32.totalorder %s28, 1
      %p67 = por %p65, %p66
      %p69 = scmp.ne.s32.totalorder %s54, %s68
      %p70 = scmp.eq.s32.totalorder %s28, 0
      %p71 = por %p69, %p70
      %s73 = sadd.s32 %s72, 1
      %p76 = scmp.eq.s32.totalorder %s22, 1
      %p77 = scmp.ne.s32.totalorder %s72, %s74
      %p78 = scmp.eq.s32.totalorder %s22, 0
      %p79 = por %p77, %p78
      %p80 = scmp.ne.s32.totalorder %s72, %s74
      %p81 = scmp.eq.s32.totalorder %s27, 1
      %p82 = por %p80, %p81
      %p83 = scmp.ne.s32.totalorder %s74, %s75
      %p84 = scmp.eq.s32.totalorder %s27, 0
      %p85 = por %p83, %p84
      %p86 = scmp.ne.s32.totalorder %s74, %s75
      %p87 = scmp.eq.s32.totalorder %s28, 1
      %p88 = por %p86, %p87
      %p90 = scmp.ne.s32.totalorder %s75, %s89
      %p91 = scmp.eq.s32.totalorder %s28, 0
      %p92 = por %p90, %p91
      %s94 = sadd.s32 %s93, 1
      %p97 = scmp.eq.s32.totalorder %s22, 1
      %p98 = scmp.ne.s32.totalorder %s93, %s95
      %p99 = scmp.eq.s32.totalorder %s22, 0
      %p100 = por %p98, %p99
      %p101 = scmp.ne.s32.totalorder %s93, %s95
      %p102 = scmp.eq.s32.totalorder %s27, 1
      %p103 = por %p101, %p102
      %p104 = scmp.ne.s32.totalorder %s95, %s96
      %p105 = scmp.eq.s32.totalorder %s27, 0
      %p106 = por %p104, %p105
      %p107 = scmp.ne.s32.totalorder %s95, %s96
      %p108 = scmp.eq.s32.totalorder %s28, 1
      %p109 = por %p107, %p108
      %p111 = scmp.ne.s32.totalorder %s96, %s110
      %p112 = scmp.eq.s32.totalorder %s28, 0
      %p113 = por %p111, %p112
      %s115 = sadd.s32 %s114, 1
      %p118 = scmp.eq.s32.totalorder %s22, 1
      %p119 = scmp.ne.s32.totalorder %s114, %s116
      %p120 = scmp.eq.s32.totalorder %s22, 0
      %p121 = por %p119, %p120
      %p122 = scmp.ne.s32.totalorder %s114, %s116
      %p123 = scmp.eq.s32.totalorder %s27, 1
      %p124 = por %p122, %p123
      %p125 = scmp.ne.s32.totalorder %s116, %s117
      %p126 = scmp.eq.s32.totalorder %s27, 0
      %p127 = por %p125, %p126
      %p128 = scmp.ne.s32.totalorder %s116, %s117
      %p129 = scmp.eq.s32.totalorder %s28, 1
      %p130 = por %p128, %p129
      %p132 = scmp.ne.s32.totalorder %s117, %s131
      %p133 = scmp.eq.s32.totalorder %s28, 0
      %p134 = por %p132, %p133
      %s135 = ssub.s32 %s22, %s29
      %p136 = scmp.eq.s32.totalorder %s135, 0
      %s138 = sadd.s32 %s137, 1
      %s139 = scalar_select %p136, %s137, %s138
      %p142 = pneg %p136
      %p143 = scmp.eq.s32.totalorder %s22, 1
      %p144 = por %p142, %p143
      %p145 = scmp.ne.s32.totalorder %s137, %s140
      %p146 = scmp.eq.s32.totalorder %s22, 0
      %p147 = por %p145, %p146
      %p148 = scmp.ne.s32.totalorder %s137, %s140
      %p149 = scmp.eq.s32.totalorder %s27, 1
      %p150 = por %p148, %p149
      %p151 = scmp.ne.s32.totalorder %s140, %s141
      %p152 = scmp.eq.s32.totalorder %s27, 0
      %p153 = por %p151, %p152
      %p154 = scmp.ne.s32.totalorder %s140, %s141
      %p155 = scmp.eq.s32.totalorder %s28, 1
      %p156 = por %p154, %p155
      %p158 = scmp.ne.s32.totalorder %s141, %s157
      %p159 = scmp.eq.s32.totalorder %s28, 0
      %p160 = por %p158, %p159
      %s161 = ssub.s32 %s22, %s29
      %p162 = scmp.eq.s32.totalorder %s161, 0
      %s164 = sadd.s32 %s163, 1
      %s165 = scalar_select %p162, %s163, %s164
      %p168 = pneg %p162
      %p169 = scmp.eq.s32.totalorder %s22, 1
      %p170 = por %p168, %p169
      %p171 = scmp.ne.s32.totalorder %s163, %s166
      %p172 = scmp.eq.s32.totalorder %s22, 0
      %p173 = por %p171, %p172
      %p174 = scmp.ne.s32.totalorder %s163, %s166
      %p175 = scmp.eq.s32.totalorder %s27, 1
      %p176 = por %p174, %p175
      %p177 = scmp.ne.s32.totalorder %s166, %s167
      %p178 = scmp.eq.s32.totalorder %s27, 0
      %p179 = por %p177, %p178
      %p180 = scmp.ne.s32.totalorder %s166, %s167
      %p181 = scmp.eq.s32.totalorder %s28, 1
      %p182 = por %p180, %p181
      %p184 = scmp.ne.s32.totalorder %s167, %s183
      %p185 = scmp.eq.s32.totalorder %s28, 0
      %p186 = por %p184, %p185
      %s187 = ssub.s32 %s22, %s29
      %p188 = scmp.eq.s32.totalorder %s187, 0
      %s190 = sadd.s32 %s189, 1
      %s191 = scalar_select %p188, %s189, %s190
      %p194 = pneg %p188
      %p195 = scmp.eq.s32.totalorder %s22, 1
      %p196 = por %p194, %p195
      %p197 = scmp.ne.s32.totalorder %s189, %s192
      %p198 = scmp.eq.s32.totalorder %s22, 0
      %p199 = por %p197, %p198
      %p200 = scmp.ne.s32.totalorder %s189, %s192
      %p201 = scmp.eq.s32.totalorder %s27, 1
      %p202 = por %p200, %p201
      %p203 = scmp.ne.s32.totalorder %s192, %s193
      %p204 = scmp.eq.s32.totalorder %s27, 0
      %p205 = por %p203, %p204
      %p206 = scmp.ne.s32.totalorder %s192, %s193
      %p207 = scmp.eq.s32.totalorder %s28, 1
      %p208 = por %p206, %p207
      %p210 = scmp.ne.s32.totalorder %s193, %s209
      %p211 = scmp.eq.s32.totalorder %s28, 0
      %p212 = por %p210, %p211
      %s213 = ssub.s32 %s22, %s29
      %p214 = scmp.eq.s32.totalorder %s213, 0
      %s216 = sadd.s32 %s215, 1
      %s217 = scalar_select %p214, %s215, %s216
      %p220 = pneg %p214
      %p221 = scmp.eq.s32.totalorder %s22, 1
      %p222 = por %p220, %p221
      %p223 = scmp.ne.s32.totalorder %s215, %s218
      %p224 = scmp.eq.s32.totalorder %s22, 0
      %p225 = por %p223, %p224
      %p226 = scmp.ne.s32.totalorder %s215, %s218
      %p227 = scmp.eq.s32.totalorder %s27, 1
      %p228 = por %p226, %p227
      %p229 = scmp.ne.s32.totalorder %s218, %s219
      %p230 = scmp.eq.s32.totalorder %s27, 0
      %p231 = por %p229, %p230
      %p232 = scmp.ne.s32.totalorder %s218, %s219
      %p233 = scmp.eq.s32.totalorder %s28, 1
      %p234 = por %p232, %p233
      %p236 = scmp.ne.s32.totalorder %s219, %s235
      %p237 = scmp.eq.s32.totalorder %s28, 0
      %p238 = por %p236, %p237
      %s239 = ssub.s32 %s22, %s29
      %p240 = scmp.eq.s32.totalorder %s239, 0
      %s242 = sadd.s32 %s241, 1
      %s243 = scalar_select %p240, %s241, %s242
      %p246 = pneg %p240
      %p247 = scmp.eq.s32.totalorder %s22, 1
      %p248 = por %p246, %p247
      %p249 = scmp.ne.s32.totalorder %s241, %s244
      %p250 = scmp.eq.s32.totalorder %s22, 0
      %p251 = por %p249, %p250
      %p252 = scmp.ne.s32.totalorder %s241, %s244
      %p253 = scmp.eq.s32.totalorder %s27, 1
      %p254 = por %p252, %p253
      %p255 = scmp.ne.s32.totalorder %s244, %s245
      %p256 = scmp.eq.s32.totalorder %s27, 0
      %p257 = por %p255, %p256
      %p258 = scmp.ne.s32.totalorder %s244, %s245
      %p259 = scmp.eq.s32.totalorder %s28, 1
      %p260 = por %p258, %p259
      %p262 = scmp.ne.s32.totalorder %s245, %s261
      %p263 = scmp.eq.s32.totalorder %s28, 0
      %p264 = por %p262, %p263
      %s266 = sadd.s32 %s265, 1
      %p269 = scmp.eq.s32.totalorder %s22, 1
      %p270 = scmp.ne.s32.totalorder %s265, %s267
      %p271 = scmp.eq.s32.totalorder %s22, 0
      %p272 = por %p270, %p271
      %p273 = scmp.ne.s32.totalorder %s265, %s267
      %p274 = scmp.eq.s32.totalorder %s27, 1
      %p275 = por %p273, %p274
      %p276 = scmp.ne.s32.totalorder %s267, %s268
      %p277 = scmp.eq.s32.totalorder %s27, 0
      %p278 = por %p276, %p277
      %p279 = scmp.ne.s32.totalorder %s267, %s268
      %p280 = scmp.eq.s32.totalorder %s28, 1
      %p281 = por %p279, %p280
      %p283 = scmp.ne.s32.totalorder %s268, %s282
      %p284 = scmp.eq.s32.totalorder %s28, 0
      %p285 = por %p283, %p284
      %s287 = sadd.s32 %s286, 1
      %p290 = scmp.eq.s32.totalorder %s22, 1
      %p291 = scmp.ne.s32.totalorder %s286, %s288
      %p292 = scmp.eq.s32.totalorder %s22, 0
      %p293 = por %p291, %p292
      %p294 = scmp.ne.s32.totalorder %s286, %s288
      %p295 = scmp.eq.s32.totalorder %s27, 1
      %p296 = por %p294, %p295
      %p297 = scmp.ne.s32.totalorder %s288, %s289
      %p298 = scmp.eq.s32.totalorder %s27, 0
      %p299 = por %p297, %p298
      %p300 = scmp.ne.s32.totalorder %s288, %s289
      %p301 = scmp.eq.s32.totalorder %s28, 1
      %p302 = por %p300, %p301
      %p304 = scmp.ne.s32.totalorder %s289, %s303
      %p305 = scmp.eq.s32.totalorder %s28, 0
      %p306 = por %p304, %p305
      %s308 = sadd.s32 %s307, 1
      %p311 = scmp.eq.s32.totalorder %s22, 1
      %p312 = scmp.ne.s32.totalorder %s307, %s309
      %p313 = scmp.eq.s32.totalorder %s22, 0
      %p314 = por %p312, %p313
      %p315 = scmp.ne.s32.totalorder %s307, %s309
      %p316 = scmp.eq.s32.totalorder %s27, 1
      %p317 = por %p315, %p316
      %p318 = scmp.ne.s32.totalorder %s309, %s310
      %p319 = scmp.eq.s32.totalorder %s27, 0
      %p320 = por %p318, %p319
      %p321 = scmp.ne.s32.totalorder %s309, %s310
      %p322 = scmp.eq.s32.totalorder %s28, 1
      %p323 = por %p321, %p322
      %p325 = scmp.ne.s32.totalorder %s310, %s324
      %p326 = scmp.eq.s32.totalorder %s28, 0
      %p327 = por %p325, %p326
      %p328 = scmp.le.s32.totalorder 1, %s22
      %p329 = scmp.lt.s32.totalorder %s22, 3
      %p330 = pnand %p328, %p329
      %p331 = pneg %p330
      // Predicated region
      $region9: #{tpu_custom_call.1} parent=5 // pred_check
        _
      $region10: #{tpu_custom_call.1} parent=5 // pred_check_branch
        %333 = sbr.rel (%p330) target = $region12
      $region11: #{tpu_custom_call.1} parent=5 // pred_region
        %s334 = ssub.s32 %s22, 1
        // Predicated region
        $region13: #{tpu_custom_call.1} parent=11 // pred_check
          %p335 = pneg %p43
        $region14: #{tpu_custom_call.1} parent=11 // pred_check_branch
          %337 = sbr.rel (%p335) target = $region16
        $region15: #{tpu_custom_call.1} parent=11 // pred_region
          %s339 = ssub.s32 128, 128
          %340 = vsyncadd [#allocation4], %s339
          %s342 = sshll.u32 [#allocation3], 4
          %s343 = int_to_ptr.vmem [resolvable:$true] %s342
          %345 = dma.hbm_to_vmem [thread:$0]  %s0, 128, %s343, [#allocation4]
        $region16: #{tpu_custom_call.1} parent=11 // pred_fallthru
          _
        // Predicated region
        $region17: #{tpu_custom_call.1} parent=11 // pred_check
          %p346 = pneg %p64
        $region18: #{tpu_custom_call.1} parent=11 // pred_check_branch
          %348 = sbr.rel (%p346) target = $region20
        $region19: #{tpu_custom_call.1} parent=11 // pred_region
          %s350 = ssub.s32 128, 128
          %351 = vsyncadd [#allocation7], %s350
          %s353 = sshll.u32 [#allocation6], 4
          %s354 = int_to_ptr.vmem [resolvable:$true] %s353
          %356 = dma.hbm_to_vmem [thread:$0]  %s1, 128, %s354, [#allocation7]
        $region20: #{tpu_custom_call.1} parent=11 // pred_fallthru
          _
        // Predicated region
        $region21: #{tpu_custom_call.1} parent=11 // pred_check
          %p357 = pneg %p85
        $region22: #{tpu_custom_call.1} parent=11 // pred_check_branch
          %359 = sbr.rel (%p357) target = $region24
        $region23: #{tpu_custom_call.1} parent=11 // pred_region
          %s361 = ssub.s32 64, 64
          %362 = vsyncadd [#allocation7], %s361
          %s364 = sshll.u32 [#allocation8], 4
          %s365 = int_to_ptr.vmem [resolvable:$true] %s364
          %367 = dma.hbm_to_vmem [thread:$0]  %s2, 64, %s365, [#allocation7]
        $region24: #{tpu_custom_call.1} parent=11 // pred_fallthru
          _
        // Predicated region
        $region25: #{tpu_custom_call.1} parent=11 // pred_check
          %p368 = pneg %p106
        $region26: #{tpu_custom_call.1} parent=11 // pred_check_branch
          %370 = sbr.rel (%p368) target = $region28
        $region27: #{tpu_custom_call.1} parent=11 // pred_region
          _
        $region28: #{tpu_custom_call.1} parent=11 // pred_fallthru
          _
        // Predicated region
        $region29: #{tpu_custom_call.1} parent=11 // pred_check
          %p371 = pneg %p127
        $region30: #{tpu_custom_call.1} parent=11 // pred_check_branch
          %373 = sbr.rel (%p371) target = $region32
        $region31: #{tpu_custom_call.1} parent=11 // pred_region
          %s375 = ssub.s32 32, 32
          %376 = vsyncadd [#allocation10], %s375
          %s378 = sshll.u32 [#allocation9], 4
          %s379 = int_to_ptr.vmem [resolvable:$true] %s378
          %381 = dma.hbm_to_vmem [thread:$0]  %s4, 32, %s379, [#allocation10]
        $region32: #{tpu_custom_call.1} parent=11 // pred_fallthru
          _
        // Predicated region
        $region33: #{tpu_custom_call.1} parent=11 // pred_check
          %p382 = pneg %p278
        $region34: #{tpu_custom_call.1} parent=11 // pred_check_branch
          %384 = sbr.rel (%p382) target = $region36
        $region35: #{tpu_custom_call.1} parent=11 // pred_region
          %s386 = ssub.s32 512, 512
          %387 = vsyncadd [#allocation7], %s386
          %s388 = sshll.u32 [#allocation15], 4
          %s389 = int_to_ptr.vmem [resolvable:$true] %s388
          %394 = dma.hbm_to_vmem [thread:$0]  %s10, 512, %s389, [#allocation7], 128, 128, 8
        $region36: #{tpu_custom_call.1} parent=11 // pred_fallthru
          _
        // Predicated region
        $region37: #{tpu_custom_call.1} parent=11 // pred_check
          %p395 = pneg %p299
        $region38: #{tpu_custom_call.1} parent=11 // pred_check_branch
          %397 = sbr.rel (%p395) target = $region40
        $region39: #{tpu_custom_call.1} parent=11 // pred_region
          _
        $region40: #{tpu_custom_call.1} parent=11 // pred_fallthru
          _
      $region12: #{tpu_custom_call.1} parent=5 // pred_fallthru
        _
      %p398 = scmp.lt.s32.totalorder %s22, 2
      // Predicated region
      $region41: #{tpu_custom_call.1} parent=5 // pred_check
        %p399 = pneg %p398
      $region42: #{tpu_custom_call.1} parent=5 // pred_check_branch
        %401 = sbr.rel (%p399) target = $region44
      $region43: #{tpu_custom_call.1} parent=5 // pred_region
        // Predicated region
        $region45: #{tpu_custom_call.1} parent=43 // pred_check
          %p402 = pneg %p147
        $region46: #{tpu_custom_call.1} parent=43 // pred_check_branch
          %404 = sbr.rel (%p402) target = $region48
        $region47: #{tpu_custom_call.1} parent=43 // pred_region
          %s405 = sand.u32 %s22, 1
          %s406 = scalar_lea.sflag [#allocation4], %s405
          %s407 = sand.u32 %s137, 1
          %s408 = smul.addr %s407, 32
          %s409 = scalar_lea.vmem [#allocation11], %s408
          %s411 = ssub.s32 512, 512
          %412 = vsyncadd %s406, %s411
          %s413 = smul.addr %s22, 4
          %s414 = smul.addr %s413, 128
          %s415 = scalar_lea.hbm %s5, %s414
          %s416 = sshll.u32 %s409, 4
          %s417 = int_to_ptr.vmem [resolvable:$true] %s416
          %422 = dma.hbm_to_vmem [thread:$0]  %s415, 512, %s417, %s406, 128, 128, 8
        $region48: #{tpu_custom_call.1} parent=43 // pred_fallthru
          _
        // Predicated region
        $region49: #{tpu_custom_call.1} parent=43 // pred_check
          %p423 = pneg %p173
        $region50: #{tpu_custom_call.1} parent=43 // pred_check_branch
          %425 = sbr.rel (%p423) target = $region52
        $region51: #{tpu_custom_call.1} parent=43 // pred_region
          %s426 = sand.u32 %s22, 1
          %s427 = scalar_lea.sflag [#allocation4], %s426
          %s428 = sand.u32 %s163, 1
          %s429 = scalar_lea.vmem [#allocation12], %s428
          %s431 = ssub.s32 16, 16
          %432 = vsyncadd %s427, %s431
          %s433 = smul.addr %s22, 16
          %s434 = scalar_lea.hbm %s6, %s433
          %s436 = sshll.u32 %s429, 4
          %s437 = int_to_ptr.vmem [resolvable:$true] %s436
          %439 = dma.hbm_to_vmem [thread:$0]  %s434, 16, %s437, %s427
        $region52: #{tpu_custom_call.1} parent=43 // pred_fallthru
          _
        // Predicated region
        $region53: #{tpu_custom_call.1} parent=43 // pred_check
          %p440 = pneg %p199
        $region54: #{tpu_custom_call.1} parent=43 // pred_check_branch
          %442 = sbr.rel (%p440) target = $region56
        $region55: #{tpu_custom_call.1} parent=43 // pred_region
          %s443 = sand.u32 %s22, 1
          %s444 = scalar_lea.sflag [#allocation4], %s443
          %s445 = sand.u32 %s189, 1
          %s446 = smul.addr %s445, 32
          %s447 = scalar_lea.vmem [#allocation13], %s446
          %s449 = ssub.s32 512, 512
          %450 = vsyncadd %s444, %s449
          %s451 = smul.addr %s22, 4
          %s452 = smul.addr %s451, 128
          %s453 = scalar_lea.hbm %s7, %s452
          %s454 = sshll.u32 %s447, 4
          %s455 = int_to_ptr.vmem [resolvable:$true] %s454
          %460 = dma.hbm_to_vmem [thread:$0]  %s453, 512, %s455, %s444, 128, 128, 8
        $region56: #{tpu_custom_call.1} parent=43 // pred_fallthru
          _
        // Predicated region
        $region57: #{tpu_custom_call.1} parent=43 // pred_check
          %p461 = pneg %p225
        $region58: #{tpu_custom_call.1} parent=43 // pred_check_branch
          %463 = sbr.rel (%p461) target = $region60
        $region59: #{tpu_custom_call.1} parent=43 // pred_region
          %s464 = sand.u32 %s22, 1
          %s465 = scalar_lea.sflag [#allocation4], %s464
          %s466 = sand.u32 %s215, 1
          %s467 = smul.addr %s466, 64
          %s468 = scalar_lea.vmem [#allocation14], %s467
          %s470 = ssub.s32 1024, 1024
          %471 = vsyncadd %s465, %s470
          %s472 = smul.addr %s22, 8
          %s473 = smul.addr %s472, 128
          %s474 = scalar_lea.hbm %s8, %s473
          %s475 = sshll.u32 %s468, 4
          %s476 = int_to_ptr.vmem [resolvable:$true] %s475
          %481 = dma.hbm_to_vmem [thread:$0]  %s474, 1024, %s476, %s465, 128, 128, 8
        $region60: #{tpu_custom_call.1} parent=43 // pred_fallthru
          _
        // Predicated region
        $region61: #{tpu_custom_call.1} parent=43 // pred_check
          %p482 = pneg %p251
        $region62: #{tpu_custom_call.1} parent=43 // pred_check_branch
          %484 = sbr.rel (%p482) target = $region64
        $region63: #{tpu_custom_call.1} parent=43 // pred_region
          %p485 = scmp.lt.s32.totalorder %s22, 1
          %s486 = scalar_select %p485, %s22, 1
          %s487 = smul.addr %s486, 8
          %s488 = scalar_lea.vmem %s9, %s487
        $region64: #{tpu_custom_call.1} parent=43 // pred_fallthru
          _
      $region44: #{tpu_custom_call.1} parent=5 // pred_fallthru
        _
      %p489 = scmp.le.s32.totalorder 1, %s22
      %p490 = scmp.lt.s32.totalorder %s22, 3
      %p491 = pnand %p489, %p490
      %p492 = pneg %p491
      // Predicated region
      $region65: #{tpu_custom_call.1} parent=5 // pred_check
        _
      $region66: #{tpu_custom_call.1} parent=5 // pred_check_branch
        %494 = sbr.rel (%p491) target = $region68
      $region67: #{tpu_custom_call.1} parent=5 // pred_region
        %s495 = ssub.s32 %s22, 1
        // Predicated region
        $region69: #{tpu_custom_call.1} parent=67 // pred_check
          %p496 = pneg %p43
        $region70: #{tpu_custom_call.1} parent=67 // pred_check_branch
          %498 = sbr.rel (%p496) target = $region72
        $region71: #{tpu_custom_call.1} parent=67 // pred_region
          %499 = dma.done [#allocation4], 128
        $region72: #{tpu_custom_call.1} parent=67 // pred_fallthru
          _
        // Predicated region
        $region73: #{tpu_custom_call.1} parent=67 // pred_check
          %p500 = pneg %p64
        $region74: #{tpu_custom_call.1} parent=67 // pred_check_branch
          %502 = sbr.rel (%p500) target = $region76
        $region75: #{tpu_custom_call.1} parent=67 // pred_region
          %503 = dma.done [#allocation7], 128
        $region76: #{tpu_custom_call.1} parent=67 // pred_fallthru
          _
        // Predicated region
        $region77: #{tpu_custom_call.1} parent=67 // pred_check
          %p504 = pneg %p85
        $region78: #{tpu_custom_call.1} parent=67 // pred_check_branch
          %506 = sbr.rel (%p504) target = $region80
        $region79: #{tpu_custom_call.1} parent=67 // pred_region
          %507 = dma.done [#allocation7], 64
        $region80: #{tpu_custom_call.1} parent=67 // pred_fallthru
          _
        // Predicated region
        $region81: #{tpu_custom_call.1} parent=67 // pred_check
          %p508 = pneg %p127
        $region82: #{tpu_custom_call.1} parent=67 // pred_check_branch
          %510 = sbr.rel (%p508) target = $region84
        $region83: #{tpu_custom_call.1} parent=67 // pred_region
          %511 = dma.done [#allocation10], 32
        $region84: #{tpu_custom_call.1} parent=67 // pred_fallthru
          _
        %s512 = sand.u32 %s27, 1
        %s513 = scalar_lea.sflag [#allocation4], %s512
        %s514 = sand.u32 %s140, 1
        %s515 = smul.addr %s514, 32
        %s516 = scalar_lea.vmem [#allocation11], %s515
        // Predicated region
        $region85: #{tpu_custom_call.1} parent=67 // pred_check
          %p517 = pneg %p153
        $region86: #{tpu_custom_call.1} parent=67 // pred_check_branch
          %519 = sbr.rel (%p517) target = $region88
        $region87: #{tpu_custom_call.1} parent=67 // pred_region
          %520 = dma.done %s513, 512
        $region88: #{tpu_custom_call.1} parent=67 // pred_fallthru
          _
        %s521 = sand.u32 %s27, 1
        %s522 = scalar_lea.sflag [#allocation4], %s521
        %s523 = sand.u32 %s166, 1
        %s524 = scalar_lea.vmem [#allocation12], %s523
        // Predicated region
        $region89: #{tpu_custom_call.1} parent=67 // pred_check
          %p525 = pneg %p179
        $region90: #{tpu_custom_call.1} parent=67 // pred_check_branch
          %527 = sbr.rel (%p525) target = $region92
        $region91: #{tpu_custom_call.1} parent=67 // pred_region
          %528 = dma.done %s522, 16
        $region92: #{tpu_custom_call.1} parent=67 // pred_fallthru
          _
        %s529 = sand.u32 %s27, 1
        %s530 = scalar_lea.sflag [#allocation4], %s529
        %s531 = sand.u32 %s192, 1
        %s532 = smul.addr %s531, 32
        %s533 = scalar_lea.vmem [#allocation13], %s532
        // Predicated region
        $region93: #{tpu_custom_call.1} parent=67 // pred_check
          %p534 = pneg %p205
        $region94: #{tpu_custom_call.1} parent=67 // pred_check_branch
          %536 = sbr.rel (%p534) target = $region96
        $region95: #{tpu_custom_call.1} parent=67 // pred_region
          %537 = dma.done %s530, 512
        $region96: #{tpu_custom_call.1} parent=67 // pred_fallthru
          _
        %s538 = sand.u32 %s27, 1
        %s539 = scalar_lea.sflag [#allocation4], %s538
        %s540 = sand.u32 %s218, 1
        %s541 = smul.addr %s540, 64
        %s542 = scalar_lea.vmem [#allocation14], %s541
        // Predicated region
        $region97: #{tpu_custom_call.1} parent=67 // pred_check
          %p543 = pneg %p231
        $region98: #{tpu_custom_call.1} parent=67 // pred_check_branch
          %545 = sbr.rel (%p543) target = $region100
        $region99: #{tpu_custom_call.1} parent=67 // pred_region
          %546 = dma.done %s539, 1024
        $region100: #{tpu_custom_call.1} parent=67 // pred_fallthru
          _
        // Predicated region
        $region101: #{tpu_custom_call.1} parent=67 // pred_check
          %p547 = pneg %p278
        $region102: #{tpu_custom_call.1} parent=67 // pred_check_branch
          %549 = sbr.rel (%p547) target = $region104
        $region103: #{tpu_custom_call.1} parent=67 // pred_region
          %550 = dma.done [#allocation7], 512
        $region104: #{tpu_custom_call.1} parent=67 // pred_fallthru
          _
        %p551 = pneg %p43
        %p552 = pneg %p40
        %p553 = pneg %p64
        %p554 = pneg %p61
        %p555 = pneg %p85
        %p556 = pneg %p82
        %p557 = pneg %p106
        %p558 = pneg %p103
        %p559 = pneg %p127
        %p560 = pneg %p124
        %s561 = sand.u32 %s27, 1
        %s562 = scalar_lea.sflag [#allocation4], %s561
        %s563 = sand.u32 %s140, 1
        %s564 = smul.addr %s563, 32
        %s565 = scalar_lea.vmem [#allocation11], %s564
        %p566 = pneg %p153
        %p567 = pneg %p150
        %s568 = sand.u32 %s27, 1
        %s569 = scalar_lea.sflag [#allocation4], %s568
        %s570 = sand.u32 %s166, 1
        %s571 = scalar_lea.vmem [#allocation12], %s570
        %p572 = pneg %p179
        %p573 = pneg %p176
        %s574 = sand.u32 %s27, 1
        %s575 = scalar_lea.sflag [#allocation4], %s574
        %s576 = sand.u32 %s192, 1
        %s577 = smul.addr %s576, 32
        %s578 = scalar_lea.vmem [#allocation13], %s577
        %p579 = pneg %p205
        %p580 = pneg %p202
        %s581 = sand.u32 %s27, 1
        %s582 = scalar_lea.sflag [#allocation4], %s581
        %s583 = sand.u32 %s218, 1
        %s584 = smul.addr %s583, 64
        %s585 = scalar_lea.vmem [#allocation14], %s584
        %p586 = pneg %p231
        %p587 = pneg %p228
        %p588 = scmp.lt.s32.totalorder %s27, 1
        %s589 = scalar_select %p588, %s27, 1
        %s590 = smul.addr %s589, 8
        %s591 = scalar_lea.vmem %s9, %s590
        %p592 = pneg %p257
        %p593 = pneg %p254
        %p594 = pneg %p278
        %p595 = pneg %p275
        %p596 = pneg %p299
        %p597 = pneg %p296
        %p598 = pneg %p320
        %p599 = pneg %p317
        %p600 = scmp.lt.s32.totalorder %s27, 1
        %s601 = scalar_select %p600, %s27, 1
        %s602 = smul.addr %s601, 8
        %s603 = scalar_lea.vmem %s9, %s602
        %p605 = scmp.eq.s32.totalorder %s27, 0
        // Predicated region
        $region105: #{tpu_custom_call.1} parent=67 // pred_check
          %p606 = pneg %p605
        $region106: #{tpu_custom_call.1} parent=67 // pred_check_branch
          %608 = sbr.rel (%p606) target = $region108
        $region107: #{tpu_custom_call.1} parent=67 // pred_region
          %v609 = vld [vmem:[#allocation3] sm:$0xff]
          %v610 = vld [vmem:[#allocation6] sm:$0xff]
          %v611 = vld [vmem:[#allocation8] sm:$0x1]
          %v612 = vld [vmem:[#allocation8 + $0x1] sm:$0x1]
          %vm613 = vcmask 130048
          %v614 = vsel %vm613, %v609, 0.0
          %615 = vadd.xlane.f32.xlu0 %v614
          %v616 = vpop.xlane.xlu0 %615
          %v617 = vrcp.pop 16.0
          %v618 = vmul.f32 %v616, %v617
          %v619 = vsub.f32 %v609, %v618
          %v620 = vmul.f32 %v619, %v619
          %v621 = vsel %vm613, %v620, 0.0
          %622 = vadd.xlane.f32.xlu0 %v621
          %v623 = vpop.xlane.xlu0 %622
          %v624 = vmul.f32 %v623, %v617
          %v625 = vadd.f32 %v624, 1e-05
          %v626 = vrsqrt.pop %v625
          %v627 = vmul.f32 %v619, %v626
          %v628 = vlaneseq
          %v629 = vshrl.u32 %v628, 7
          %v630 = vsub.s32 0, %v629
          %v631 = vrot.slane %v611, %v630
          %v632 = vmul.f32 %v627, %v631
          %v633 = vlaneseq
          %v634 = vshrl.u32 %v633, 7
          %v635 = vsub.s32 0, %v634
          %v636 = vrot.slane %v612, %v635
          %v637 = vadd.f32 %v632, %v636
          %v638 = vld [vmem:[#allocation8 + $0x2] sm:$0x1]
          %v639 = vld [vmem:[#allocation8 + $0x3] sm:$0x1]
          %v640 = vsel %vm613, %v610, 0.0
          %641 = vadd.xlane.f32.xlu0 %v640
          %v642 = vpop.xlane.xlu0 %641
          %v643 = vmul.f32 %v642, %v617
          %v644 = vsub.f32 %v610, %v643
          %v645 = vmul.f32 %v644, %v644
          %v646 = vsel %vm613, %v645, 0.0
          %647 = vadd.xlane.f32.xlu0 %v646
          %v648 = vpop.xlane.xlu0 %647
          %v649 = vmul.f32 %v648, %v617
          %v650 = vadd.f32 %v649, 1e-05
          %v651 = vrsqrt.pop %v650
          %v652 = vmul.f32 %v644, %v651
          %v653 = vlaneseq
          %v654 = vshrl.u32 %v653, 7
          %v655 = vsub.s32 0, %v654
          %v656 = vrot.slane %v638, %v655
          %v657 = vmul.f32 %v652, %v656
          %v658 = vlaneseq
          %v659 = vshrl.u32 %v658, 7
          %v660 = vsub.s32 0, %v659
          %v661 = vrot.slane %v639, %v660
          %v662 = vadd.f32 %v657, %v661
          %v663 = vld [vmem:[%s3] sm:$0xff]
          %v664 = vld [vmem:[%s3 + $0x8] sm:$0xff]
          %v665 = vpack.c.bf16 %v637, %v637
          %v666 = vpack.c.bf16 %v664, %v663
          %v667 = vld [vmem:[#allocation9] sm:$0x1]
          %v668 = vlaneseq
          %v669 = vshrl.u32 %v668, 7
          %v670 = vsub.s32 0, %v669
          %v671 = vrot.slane %v667, %v670
          %v673 = vsel %vm613, %v665, 0
          %675 = vmatprep.subr.bf16.mxu0 0
          %676 = vmatpush1.bf16.msra.mxu0 0
          %677 = vmatprep.subr.bf16.mxu0 0
          %678 = vmatpush1.bf16.msra.mxu0 0
          %679 = vmatprep.subr.bf16.mxu0 0
          %680 = vmatpush1.bf16.msra.mxu0 0
          %681 = vmatprep.subr.bf16.mxu0 0
          %682 = vmatpush1.bf16.msra.mxu0 0
          %683 = vmatprep.subr.bf16.mxu0 0
          %684 = vmatpush1.bf16.msra.mxu0 0
          %685 = vmatprep.subr.bf16.mxu0 0
          %686 = vmatpush1.bf16.msra.mxu0 0
          %687 = vmatprep.subr.bf16.mxu0 0
          %688 = vmatpush1.bf16.msra.mxu0 0
          %689 = vmatprep.subr.bf16.mxu0 0
          %690 = vmatpush1.bf16.msra.mxu0 %v666
          %691 = vmatprep.subr.bf16.mxu0 0
          %692 = vmatpush2.bf16.msra.mxu0 0
          %693 = vmatprep.subr.bf16.mxu0 0
          %694 = vmatpush2.bf16.msra.mxu0 0
          %695 = vmatprep.subr.bf16.mxu0 0
          %696 = vmatpush2.bf16.msra.mxu0 0
          %697 = vmatprep.subr.bf16.mxu0 0
          %698 = vmatpush2.bf16.msra.mxu0 0
          %699 = vmatprep.subr.bf16.mxu0 0
          %700 = vmatpush2.bf16.msra.mxu0 0
          %701 = vmatprep.subr.bf16.mxu0 0
          %702 = vmatpush2.bf16.msra.mxu0 0
          %703 = vmatprep.subr.bf16.mxu0 0
          %704 = vmatpush2.bf16.msra.mxu0 0
          %705 = vmatprep.subr.bf16.mxu0 0
          %706 = vmatpush2.bf16.msra.mxu0 0
          %707 = vmatprep.mubr.bf16.mxu0 0
          %708 = vmatmul.mubr.bf16.gmra.mxu0 %v673
          %v709 = vpop.f32.mrf.mxu0
          %v710 = vadd.f32 %v671, %v709
          %v711 = vpop.f32.mrf.mxu0
          %v712 = vpop.f32.mrf.mxu0
          %v713 = vpop.f32.mrf.mxu0
          %714 = vdwg.mxu0
          %s715 = scalar_lea.vmem %s3, 16
          %v716 = vld [vmem:[%s715] sm:$0xff]
          %v717 = vld [vmem:[%s715 + $0x8] sm:$0xff]
          %v718 = vpack.c.bf16 %v662, %v662
          %v719 = vpack.c.bf16 %v717, %v716
          %v721 = vsel %vm613, %v718, 0
          %723 = vmatprep.subr.bf16.mxu0 0
          %724 = vmatpush1.bf16.msra.mxu0 0
          %725 = vmatprep.subr.bf16.mxu0 0
          %726 = vmatpush1.bf16.msra.mxu0 0
          %727 = vmatprep.subr.bf16.mxu0 0
          %728 = vmatpush1.bf16.msra.mxu0 0
          %729 = vmatprep.subr.bf16.mxu0 0
          %730 = vmatpush1.bf16.msra.mxu0 0
          %731 = vmatprep.subr.bf16.mxu0 0
          %732 = vmatpush1.bf16.msra.mxu0 0
          %733 = vmatprep.subr.bf16.mxu0 0
          %734 = vmatpush1.bf16.msra.mxu0 0
          %735 = vmatprep.subr.bf16.mxu0 0
          %736 = vmatpush1.bf16.msra.mxu0 0
          %737 = vmatprep.subr.bf16.mxu0 0
          %738 = vmatpush1.bf16.msra.mxu0 %v719
          %739 = vmatprep.subr.bf16.mxu0 0
          %740 = vmatpush2.bf16.msra.mxu0 0
          %741 = vmatprep.subr.bf16.mxu0 0
          %742 = vmatpush2.bf16.msra.mxu0 0
          %743 = vmatprep.subr.bf16.mxu0 0
          %744 = vmatpush2.bf16.msra.mxu0 0
          %745 = vmatprep.subr.bf16.mxu0 0
          %746 = vmatpush2.bf16.msra.mxu0 0
          %747 = vmatprep.subr.bf16.mxu0 0
          %748 = vmatpush2.bf16.msra.mxu0 0
          %749 = vmatprep.subr.bf16.mxu0 0
          %750 = vmatpush2.bf16.msra.mxu0 0
          %751 = vmatprep.subr.bf16.mxu0 0
          %752 = vmatpush2.bf16.msra.mxu0 0
          %753 = vmatprep.subr.bf16.mxu0 0
          %754 = vmatpush2.bf16.msra.mxu0 0
          %755 = vmatprep.mubr.bf16.mxu0 0
          %756 = vmatmul.mubr.bf16.gmra.mxu0 %v721
          %v757 = vpop.f32.mrf.mxu0
          %v758 = vadd.f32 0.0, %v757
          %v759 = vpop.f32.mrf.mxu0
          %v760 = vpop.f32.mrf.mxu0
          %v761 = vpop.f32.mrf.mxu0
          %762 = vdwg.mxu0
          %v763 = vadd.f32 %v710, %v758
          %v764 = vld [vmem:[#allocation9 + $0x1] sm:$0x1]
          %v765 = vlaneseq
          %v766 = vshrl.u32 %v765, 7
          %v767 = vsub.s32 0, %v766
          %v768 = vrot.slane %v764, %v767
          %v769 = vadd.f32 %v763, %v768
          %vm770 = vcmask 261120
          %771 = vst.msk [vmem:[#allocation2] sm:$0xff] %vm770, %v769
        $region108: #{tpu_custom_call.1} parent=67 // pred_fallthru
          _
        %v772 = vld [vmem:[#allocation2] sm:$0xff]
        %v773 = vld [vmem:[%s516] sm:$0xff]
        %v774 = vld [vmem:[%s516 + $0x8] sm:$0xff]
        %v775 = vld [vmem:[%s516 + $0x10] sm:$0xff]
        %v776 = vld [vmem:[%s516 + $0x18] sm:$0xff]
        %v777 = vpack.c.bf16 %v772, %v772
        %v778 = vpack.c.bf16 %v774, %v773
        %v779 = vpack.c.bf16 %v776, %v775
        %v780 = vld [vmem:[%s524] sm:$0x1]
        %v782 = vlaneseq
        %v783 = vshrl.u32 %v782, 7
        %v784 = vsub.s32 0, %v783
        %v785 = vrot.slane %v780, %v784
        %vm787 = vcmask 261120
        %v789 = vsel %vm787, %v777, 0
        %791 = vmatprep.subr.bf16.mxu0 0
        %792 = vmatpush1.bf16.msra.mxu0 0
        %793 = vmatprep.subr.bf16.mxu0 0
        %794 = vmatpush1.bf16.msra.mxu0 0
        %795 = vmatprep.subr.bf16.mxu0 0
        %796 = vmatpush1.bf16.msra.mxu0 0
        %797 = vmatprep.subr.bf16.mxu0 0
        %798 = vmatpush1.bf16.msra.mxu0 0
        %799 = vmatprep.subr.bf16.mxu0 0
        %800 = vmatpush1.bf16.msra.mxu0 0
        %801 = vmatprep.subr.bf16.mxu0 0
        %802 = vmatpush1.bf16.msra.mxu0 0
        %803 = vmatprep.subr.bf16.mxu0 0
        %804 = vmatpush1.bf16.msra.mxu0 %v779
        %805 = vmatprep.subr.bf16.mxu0 0
        %806 = vmatpush1.bf16.msra.mxu0 %v778
        %807 = vmatprep.subr.bf16.mxu0 0
        %808 = vmatpush2.bf16.msra.mxu0 0
        %809 = vmatprep.subr.bf16.mxu0 0
        %810 = vmatpush2.bf16.msra.mxu0 0
        %811 = vmatprep.subr.bf16.mxu0 0
        %812 = vmatpush2.bf16.msra.mxu0 0
        %813 = vmatprep.subr.bf16.mxu0 0
        %814 = vmatpush2.bf16.msra.mxu0 0
        %815 = vmatprep.subr.bf16.mxu0 0
        %816 = vmatpush2.bf16.msra.mxu0 0
        %817 = vmatprep.subr.bf16.mxu0 0
        %818 = vmatpush2.bf16.msra.mxu0 0
        %819 = vmatprep.subr.bf16.mxu0 0
        %820 = vmatpush2.bf16.msra.mxu0 0
        %821 = vmatprep.subr.bf16.mxu0 0
        %822 = vmatpush2.bf16.msra.mxu0 0
        %823 = vmatprep.mubr.bf16.mxu0 0
        %824 = vmatmul.mubr.bf16.gmra.mxu0 %v789
        %v825 = vpop.f32.mrf.mxu0
        %v826 = vadd.f32 %v785, %v825
        %v827 = vpop.f32.mrf.mxu0
        %v828 = vpop.f32.mrf.mxu0
        %v829 = vpop.f32.mrf.mxu0
        %830 = vdwg.mxu0
        %v831 = vmul.f32 %v826, 0.35355338
        %v832 = vpack.c.bf16 %v831, %v831
        %v833 = vpack.c.bf16 %v826, %v826
        %835 = vrot.lane.b32.xlu0 %v833, 96
        %v836 = vpop.permute.xlu0 %835
        %vm837 = vcmask 64512
        %v839 = vsel %vm837, %v832, 0
        %v842 = vsel %vm837, %v836, 0
        %844 = vmatprep.subr.bf16.mxu0 0
        %845 = vmatpush1.bf16.xpose.msra.mxu0 0
        %846 = vmatprep.subr.bf16.mxu0 0
        %847 = vmatpush1.bf16.xpose.msra.mxu0 0
        %848 = vmatprep.subr.bf16.mxu0 0
        %849 = vmatpush1.bf16.xpose.msra.mxu0 0
        %850 = vmatprep.subr.bf16.mxu0 0
        %851 = vmatpush1.bf16.xpose.msra.mxu0 0
        %852 = vmatprep.subr.bf16.mxu0 0
        %853 = vmatpush1.bf16.xpose.msra.mxu0 0
        %854 = vmatprep.subr.bf16.mxu0 0
        %855 = vmatpush1.bf16.xpose.msra.mxu0 0
        %856 = vmatprep.subr.bf16.mxu0 0
        %857 = vmatpush1.bf16.xpose.msra.mxu0 0
        %858 = vmatprep.subr.bf16.mxu0 0
        %859 = vmatpush1.bf16.xpose.msra.mxu0 %v842
        %860 = vmatprep.subr.bf16.mxu0 0
        %861 = vmatpush2.bf16.xpose.msra.mxu0 0
        %862 = vmatprep.subr.bf16.mxu0 0
        %863 = vmatpush2.bf16.xpose.msra.mxu0 0
        %864 = vmatprep.subr.bf16.mxu0 0
        %865 = vmatpush2.bf16.xpose.msra.mxu0 0
        %866 = vmatprep.subr.bf16.mxu0 0
        %867 = vmatpush2.bf16.xpose.msra.mxu0 0
        %868 = vmatprep.subr.bf16.mxu0 0
        %869 = vmatpush2.bf16.xpose.msra.mxu0 0
        %870 = vmatprep.subr.bf16.mxu0 0
        %871 = vmatpush2.bf16.xpose.msra.mxu0 0
        %872 = vmatprep.subr.bf16.mxu0 0
        %873 = vmatpush2.bf16.xpose.msra.mxu0 0
        %874 = vmatprep.subr.bf16.mxu0 0
        %875 = vmatpush2.bf16.xpose.msra.mxu0 0
        %876 = vmatprep.mubr.bf16.mxu0 0
        %877 = vmatmul.mubr.bf16.gmra.mxu0 %v839
        %v878 = vpop.f32.mrf.mxu0
        %v879 = vadd.f32 0.0, %v878
        %v880 = vpop.f32.mrf.mxu0
        %v881 = vpop.f32.mrf.mxu0
        %v882 = vpop.f32.mrf.mxu0
        %883 = vdwg.mxu0
        %v884 = vsel %vm837, %v879, -inf
        %885 = vmax.xlane.f32.xlu0 %v884
        %v886 = vpop.xlane.xlu0 %885
        %v887 = vsub.f32 %v879, %v886
        %v888 = vmul.f32 %v887, 1.442695
        %v889 = vpow.pop %v888
        %v890 = vsel %vm837, %v889, 0.0
        %891 = vadd.xlane.f32.xlu0 %v890
        %v892 = vpop.xlane.xlu0 %891
        %v893 = vrcp.pop %v892
        %v894 = vmul.f32 %v889, %v893
        %v895 = vpack.c.bf16 %v894, %v894
        %896 = vrot.lane.b32.xlu0 %v833, 64
        %v897 = vpop.permute.xlu0 %896
        %v899 = vsel %vm837, %v895, 0
        %vm901 = vcmask 1043456
        %v903 = vsel %vm901, %v897, 0
        %905 = vmatprep.subr.bf16.mxu0 0
        %906 = vmatpush1.bf16.msra.mxu0 0
        %907 = vmatprep.subr.bf16.mxu0 0
        %908 = vmatpush1.bf16.msra.mxu0 0
        %909 = vmatprep.subr.bf16.mxu0 0
        %910 = vmatpush1.bf16.msra.mxu0 0
        %911 = vmatprep.subr.bf16.mxu0 0
        %912 = vmatpush1.bf16.msra.mxu0 0
        %913 = vmatprep.subr.bf16.mxu0 0
        %914 = vmatpush1.bf16.msra.mxu0 0
        %915 = vmatprep.subr.bf16.mxu0 0
        %916 = vmatpush1.bf16.msra.mxu0 0
        %917 = vmatprep.subr.bf16.mxu0 0
        %918 = vmatpush1.bf16.msra.mxu0 0
        %919 = vmatprep.subr.bf16.mxu0 0
        %920 = vmatpush1.bf16.msra.mxu0 %v903
        %921 = vmatprep.subr.bf16.mxu0 0
        %922 = vmatpush2.bf16.msra.mxu0 0
        %923 = vmatprep.subr.bf16.mxu0 0
        %924 = vmatpush2.bf16.msra.mxu0 0
        %925 = vmatprep.subr.bf16.mxu0 0
        %926 = vmatpush2.bf16.msra.mxu0 0
        %927 = vmatprep.subr.bf16.mxu0 0
        %928 = vmatpush2.bf16.msra.mxu0 0
        %929 = vmatprep.subr.bf16.mxu0 0
        %930 = vmatpush2.bf16.msra.mxu0 0
        %931 = vmatprep.subr.bf16.mxu0 0
        %932 = vmatpush2.bf16.msra.mxu0 0
        %933 = vmatprep.subr.bf16.mxu0 0
        %934 = vmatpush2.bf16.msra.mxu0 0
        %935 = vmatprep.subr.bf16.mxu0 0
        %936 = vmatpush2.bf16.msra.mxu0 0
        %937 = vmatprep.mubr.bf16.mxu0 0
        %938 = vmatmul.mubr.bf16.gmra.mxu0 %v899
        %v939 = vpop.f32.mrf.mxu0
        %v940 = vadd.f32 0.0, %v939
        %v941 = vpop.f32.mrf.mxu0
        %v942 = vpop.f32.mrf.mxu0
        %v943 = vpop.f32.mrf.mxu0
        %944 = vdwg.mxu0
        %946 = vrot.lane.b32.xlu0 %v832, 120
        %v947 = vpop.permute.xlu0 %946
        %948 = vrot.lane.b32.xlu0 %v833, 88
        %v949 = vpop.permute.xlu0 %948
        %v951 = vsel %vm837, %v947, 0
        %v954 = vsel %vm837, %v949, 0
        %956 = vmatprep.subr.bf16.mxu0 0
        %957 = vmatpush1.bf16.xpose.msra.mxu0 0
        %958 = vmatprep.subr.bf16.mxu0 0
        %959 = vmatpush1.bf16.xpose.msra.mxu0 0
        %960 = vmatprep.subr.bf16.mxu0 0
        %961 = vmatpush1.bf16.xpose.msra.mxu0 0
        %962 = vmatprep.subr.bf16.mxu0 0
        %963 = vmatpush1.bf16.xpose.msra.mxu0 0
        %964 = vmatprep.subr.bf16.mxu0 0
        %965 = vmatpush1.bf16.xpose.msra.mxu0 0
        %966 = vmatprep.subr.bf16.mxu0 0
        %967 = vmatpush1.bf16.xpose.msra.mxu0 0
        %968 = vmatprep.subr.bf16.mxu0 0
        %969 = vmatpush1.bf16.xpose.msra.mxu0 0
        %970 = vmatprep.subr.bf16.mxu0 0
        %971 = vmatpush1.bf16.xpose.msra.mxu0 %v954
        %972 = vmatprep.subr.bf16.mxu0 0
        %973 = vmatpush2.bf16.xpose.msra.mxu0 0
        %974 = vmatprep.subr.bf16.mxu0 0
        %975 = vmatpush2.bf16.xpose.msra.mxu0 0
        %976 = vmatprep.subr.bf16.mxu0 0
        %977 = vmatpush2.bf16.xpose.msra.mxu0 0
        %978 = vmatprep.subr.bf16.mxu0 0
        %979 = vmatpush2.bf16.xpose.msra.mxu0 0
        %980 = vmatprep.subr.bf16.mxu0 0
        %981 = vmatpush2.bf16.xpose.msra.mxu0 0
        %982 = vmatprep.subr.bf16.mxu0 0
        %983 = vmatpush2.bf16.xpose.msra.mxu0 0
        %984 = vmatprep.subr.bf16.mxu0 0
        %985 = vmatpush2.bf16.xpose.msra.mxu0 0
        %986 = vmatprep.subr.bf16.mxu0 0
        %987 = vmatpush2.bf16.xpose.msra.mxu0 0
        %988 = vmatprep.mubr.bf16.mxu0 0
        %989 = vmatmul.mubr.bf16.gmra.mxu0 %v951
        %v990 = vpop.f32.mrf.mxu0
        %v991 = vadd.f32 0.0, %v990
        %v992 = vpop.f32.mrf.mxu0
        %v993 = vpop.f32.mrf.mxu0
        %v994 = vpop.f32.mrf.mxu0
        %995 = vdwg.mxu0
        %v996 = vsel %vm837, %v991, -inf
        %997 = vmax.xlane.f32.xlu0 %v996
        %v998 = vpop.xlane.xlu0 %997
        %v999 = vsub.f32 %v991, %v998
        %v1000 = vmul.f32 %v999, 1.442695
        %v1001 = vpow.pop %v1000
        %v1002 = vsel %vm837, %v1001, 0.0
        %1003 = vadd.xlane.f32.xlu0 %v1002
        %v1004 = vpop.xlane.xlu0 %1003
        %v1005 = vrcp.pop %v1004
        %v1006 = vmul.f32 %v1001, %v1005
        %v1007 = vpack.c.bf16 %v1006, %v1006
        %1008 = vrot.lane.b32.xlu0 %v833, 56
        %v1009 = vpop.permute.xlu0 %1008
        %v1011 = vsel %vm837, %v1007, 0
        %v1014 = vsel %vm901, %v1009, 0
        %1016 = vmatprep.subr.bf16.mxu0 0
        %1017 = vmatpush1.bf16.msra.mxu0 0
        %1018 = vmatprep.subr.bf16.mxu0 0
        %1019 = vmatpush1.bf16.msra.mxu0 0
        %1020 = vmatprep.subr.bf16.mxu0 0
        %1021 = vmatpush1.bf16.msra.mxu0 0
        %1022 = vmatprep.subr.bf16.mxu0 0
        %1023 = vmatpush1.bf16.msra.mxu0 0
        %1024 = vmatprep.subr.bf16.mxu0 0
        %1025 = vmatpush1.bf16.msra.mxu0 0
        %1026 = vmatprep.subr.bf16.mxu0 0
        %1027 = vmatpush1.bf16.msra.mxu0 0
        %1028 = vmatprep.subr.bf16.mxu0 0
        %1029 = vmatpush1.bf16.msra.mxu0 0
        %1030 = vmatprep.subr.bf16.mxu0 0
        %1031 = vmatpush1.bf16.msra.mxu0 %v1014
        %1032 = vmatprep.subr.bf16.mxu0 0
        %1033 = vmatpush2.bf16.msra.mxu0 0
        %1034 = vmatprep.subr.bf16.mxu0 0
        %1035 = vmatpush2.bf16.msra.mxu0 0
        %1036 = vmatprep.subr.bf16.mxu0 0
        %1037 = vmatpush2.bf16.msra.mxu0 0
        %1038 = vmatprep.subr.bf16.mxu0 0
        %1039 = vmatpush2.bf16.msra.mxu0 0
        %1040 = vmatprep.subr.bf16.mxu0 0
        %1041 = vmatpush2.bf16.msra.mxu0 0
        %1042 = vmatprep.subr.bf16.mxu0 0
        %1043 = vmatpush2.bf16.msra.mxu0 0
        %1044 = vmatprep.subr.bf16.mxu0 0
        %1045 = vmatpush2.bf16.msra.mxu0 0
        %1046 = vmatprep.subr.bf16.mxu0 0
        %1047 = vmatpush2.bf16.msra.mxu0 0
        %1048 = vmatprep.mubr.bf16.mxu0 0
        %1049 = vmatmul.mubr.bf16.gmra.mxu0 %v1011
        %v1050 = vpop.f32.mrf.mxu0
        %v1051 = vadd.f32 0.0, %v1050
        %v1052 = vpop.f32.mrf.mxu0
        %v1053 = vpop.f32.mrf.mxu0
        %v1054 = vpop.f32.mrf.mxu0
        %1055 = vdwg.mxu0
        %1056 = vrot.lane.b32.xlu0 %v832, 112
        %v1057 = vpop.permute.xlu0 %1056
        %1058 = vrot.lane.b32.xlu0 %v833, 80
        %v1059 = vpop.permute.xlu0 %1058
        %v1061 = vsel %vm837, %v1057, 0
        %v1064 = vsel %vm837, %v1059, 0
        %1066 = vmatprep.subr.bf16.mxu0 0
        %1067 = vmatpush1.bf16.xpose.msra.mxu0 0
        %1068 = vmatprep.subr.bf16.mxu0 0
        %1069 = vmatpush1.bf16.xpose.msra.mxu0 0
        %1070 = vmatprep.subr.bf16.mxu0 0
        %1071 = vmatpush1.bf16.xpose.msra.mxu0 0
        %1072 = vmatprep.subr.bf16.mxu0 0
        %1073 = vmatpush1.bf16.xpose.msra.mxu0 0
        %1074 = vmatprep.subr.bf16.mxu0 0
        %1075 = vmatpush1.bf16.xpose.msra.mxu0 0
        %1076 = vmatprep.subr.bf16.mxu0 0
        %1077 = vmatpush1.bf16.xpose.msra.mxu0 0
        %1078 = vmatprep.subr.bf16.mxu0 0
        %1079 = vmatpush1.bf16.xpose.msra.mxu0 0
        %1080 = vmatprep.subr.bf16.mxu0 0
        %1081 = vmatpush1.bf16.xpose.msra.mxu0 %v1064
        %1082 = vmatprep.subr.bf16.mxu0 0
        %1083 = vmatpush2.bf16.xpose.msra.mxu0 0
        %1084 = vmatprep.subr.bf16.mxu0 0
        %1085 = vmatpush2.bf16.xpose.msra.mxu0 0
        %1086 = vmatprep.subr.bf16.mxu0 0
        %1087 = vmatpush2.bf16.xpose.msra.mxu0 0
        %1088 = vmatprep.subr.bf16.mxu0 0
        %1089 = vmatpush2.bf16.xpose.msra.mxu0 0
        %1090 = vmatprep.subr.bf16.mxu0 0
        %1091 = vmatpush2.bf16.xpose.msra.mxu0 0
        %1092 = vmatprep.subr.bf16.mxu0 0
        %1093 = vmatpush2.bf16.xpose.msra.mxu0 0
        %1094 = vmatprep.subr.bf16.mxu0 0
        %1095 = vmatpush2.bf16.xpose.msra.mxu0 0
        %1096 = vmatprep.subr.bf16.mxu0 0
        %1097 = vmatpush2.bf16.xpose.msra.mxu0 0
        %1098 = vmatprep.mubr.bf16.mxu0 0
        %1099 = vmatmul.mubr.bf16.gmra.mxu0 %v1061
        %v1100 = vpop.f32.mrf.mxu0
        %v1101 = vadd.f32 0.0, %v1100
        %v1102 = vpop.f32.mrf.mxu0
        %v1103 = vpop.f32.mrf.mxu0
        %v1104 = vpop.f32.mrf.mxu0
        %1105 = vdwg.mxu0
        %v1106 = vsel %vm837, %v1101, -inf
        %1107 = vmax.xlane.f32.xlu0 %v1106
        %v1108 = vpop.xlane.xlu0 %1107
        %v1109 = vsub.f32 %v1101, %v1108
        %v1110 = vmul.f32 %v1109, 1.442695
        %v1111 = vpow.pop %v1110
        %v1112 = vsel %vm837, %v1111, 0.0
        %1113 = vadd.xlane.f32.xlu0 %v1112
        %v1114 = vpop.xlane.xlu0 %1113
        %v1115 = vrcp.pop %v1114
        %v1116 = vmul.f32 %v1111, %v1115
        %v1117 = vpack.c.bf16 %v1116, %v1116
        %1118 = vrot.lane.b32.xlu0 %v833, 48
        %v1119 = vpop.permute.xlu0 %1118
        %v1121 = vsel %vm837, %v1117, 0
        %v1124 = vsel %vm901, %v1119, 0
        %1126 = vmatprep.subr.bf16.mxu0 0
        %1127 = vmatpush1.bf16.msra.mxu0 0
        %1128 = vmatprep.subr.bf16.mxu0 0
        %1129 = vmatpush1.bf16.msra.mxu0 0
        %1130 = vmatprep.subr.bf16.mxu0 0
        %1131 = vmatpush1.bf16.msra.mxu0 0
        %1132 = vmatprep.subr.bf16.mxu0 0
        %1133 = vmatpush1.bf16.msra.mxu0 0
        %1134 = vmatprep.subr.bf16.mxu0 0
        %1135 = vmatpush1.bf16.msra.mxu0 0
        %1136 = vmatprep.subr.bf16.mxu0 0
        %1137 = vmatpush1.bf16.msra.mxu0 0
        %1138 = vmatprep.subr.bf16.mxu0 0
        %1139 = vmatpush1.bf16.msra.mxu0 0
        %1140 = vmatprep.subr.bf16.mxu0 0
        %1141 = vmatpush1.bf16.msra.mxu0 %v1124
        %1142 = vmatprep.subr.bf16.mxu0 0
        %1143 = vmatpush2.bf16.msra.mxu0 0
        %1144 = vmatprep.subr.bf16.mxu0 0
        %1145 = vmatpush2.bf16.msra.mxu0 0
        %1146 = vmatprep.subr.bf16.mxu0 0
        %1147 = vmatpush2.bf16.msra.mxu0 0
        %1148 = vmatprep.subr.bf16.mxu0 0
        %1149 = vmatpush2.bf16.msra.mxu0 0
        %1150 = vmatprep.subr.bf16.mxu0 0
        %1151 = vmatpush2.bf16.msra.mxu0 0
        %1152 = vmatprep.subr.bf16.mxu0 0
        %1153 = vmatpush2.bf16.msra.mxu0 0
        %1154 = vmatprep.subr.bf16.mxu0 0
        %1155 = vmatpush2.bf16.msra.mxu0 0
        %1156 = vmatprep.subr.bf16.mxu0 0
        %1157 = vmatpush2.bf16.msra.mxu0 0
        %1158 = vmatprep.mubr.bf16.mxu0 0
        %1159 = vmatmul.mubr.bf16.gmra.mxu0 %v1121
        %v1160 = vpop.f32.mrf.mxu0
        %v1161 = vadd.f32 0.0, %v1160
        %v1162 = vpop.f32.mrf.mxu0
        %v1163 = vpop.f32.mrf.mxu0
        %v1164 = vpop.f32.mrf.mxu0
        %1165 = vdwg.mxu0
        %1166 = vrot.lane.b32.xlu0 %v832, 104
        %v1167 = vpop.permute.xlu0 %1166
        %1168 = vrot.lane.b32.xlu0 %v833, 72
        %v1169 = vpop.permute.xlu0 %1168
        %v1171 = vsel %vm837, %v1167, 0
        %v1174 = vsel %vm837, %v1169, 0
        %1176 = vmatprep.subr.bf16.mxu0 0
        %1177 = vmatpush1.bf16.xpose.msra.mxu0 0
        %1178 = vmatprep.subr.bf16.mxu0 0
        %1179 = vmatpush1.bf16.xpose.msra.mxu0 0
        %1180 = vmatprep.subr.bf16.mxu0 0
        %1181 = vmatpush1.bf16.xpose.msra.mxu0 0
        %1182 = vmatprep.subr.bf16.mxu0 0
        %1183 = vmatpush1.bf16.xpose.msra.mxu0 0
        %1184 = vmatprep.subr.bf16.mxu0 0
        %1185 = vmatpush1.bf16.xpose.msra.mxu0 0
        %1186 = vmatprep.subr.bf16.mxu0 0
        %1187 = vmatpush1.bf16.xpose.msra.mxu0 0
        %1188 = vmatprep.subr.bf16.mxu0 0
        %1189 = vmatpush1.bf16.xpose.msra.mxu0 0
        %1190 = vmatprep.subr.bf16.mxu0 0
        %1191 = vmatpush1.bf16.xpose.msra.mxu0 %v1174
        %1192 = vmatprep.subr.bf16.mxu0 0
        %1193 = vmatpush2.bf16.xpose.msra.mxu0 0
        %1194 = vmatprep.subr.bf16.mxu0 0
        %1195 = vmatpush2.bf16.xpose.msra.mxu0 0
        %1196 = vmatprep.subr.bf16.mxu0 0
        %1197 = vmatpush2.bf16.xpose.msra.mxu0 0
        %1198 = vmatprep.subr.bf16.mxu0 0
        %1199 = vmatpush2.bf16.xpose.msra.mxu0 0
        %1200 = vmatprep.subr.bf16.mxu0 0
        %1201 = vmatpush2.bf16.xpose.msra.mxu0 0
        %1202 = vmatprep.subr.bf16.mxu0 0
        %1203 = vmatpush2.bf16.xpose.msra.mxu0 0
        %1204 = vmatprep.subr.bf16.mxu0 0
        %1205 = vmatpush2.bf16.xpose.msra.mxu0 0
        %1206 = vmatprep.subr.bf16.mxu0 0
        %1207 = vmatpush2.bf16.xpose.msra.mxu0 0
        %1208 = vmatprep.mubr.bf16.mxu0 0
        %1209 = vmatmul.mubr.bf16.gmra.mxu0 %v1171
        %v1210 = vpop.f32.mrf.mxu0
        %v1211 = vadd.f32 0.0, %v1210
        %v1212 = vpop.f32.mrf.mxu0
        %v1213 = vpop.f32.mrf.mxu0
        %v1214 = vpop.f32.mrf.mxu0
        %1215 = vdwg.mxu0
        %v1216 = vsel %vm837, %v1211, -inf
        %1217 = vmax.xlane.f32.xlu0 %v1216
        %v1218 = vpop.xlane.xlu0 %1217
        %v1219 = vsub.f32 %v1211, %v1218
        %v1220 = vmul.f32 %v1219, 1.442695
        %v1221 = vpow.pop %v1220
        %v1222 = vsel %vm837, %v1221, 0.0
        %1223 = vadd.xlane.f32.xlu0 %v1222
        %v1224 = vpop.xlane.xlu0 %1223
        %v1225 = vrcp.pop %v1224
        %v1226 = vmul.f32 %v1221, %v1225
        %v1227 = vpack.c.bf16 %v1226, %v1226
        %1228 = vrot.lane.b32.xlu0 %v833, 40
        %v1229 = vpop.permute.xlu0 %1228
        %v1231 = vsel %vm837, %v1227, 0
        %v1234 = vsel %vm901, %v1229, 0
        %1236 = vmatprep.subr.bf16.mxu0 0
        %1237 = vmatpush1.bf16.msra.mxu0 0
        %1238 = vmatprep.subr.bf16.mxu0 0
        %1239 = vmatpush1.bf16.msra.mxu0 0
        %1240 = vmatprep.subr.bf16.mxu0 0
        %1241 = vmatpush1.bf16.msra.mxu0 0
        %1242 = vmatprep.subr.bf16.mxu0 0
        %1243 = vmatpush1.bf16.msra.mxu0 0
        %1244 = vmatprep.subr.bf16.mxu0 0
        %1245 = vmatpush1.bf16.msra.mxu0 0
        %1246 = vmatprep.subr.bf16.mxu0 0
        %1247 = vmatpush1.bf16.msra.mxu0 0
        %1248 = vmatprep.subr.bf16.mxu0 0
        %1249 = vmatpush1.bf16.msra.mxu0 0
        %1250 = vmatprep.subr.bf16.mxu0 0
        %1251 = vmatpush1.bf16.msra.mxu0 %v1234
        %1252 = vmatprep.subr.bf16.mxu0 0
        %1253 = vmatpush2.bf16.msra.mxu0 0
        %1254 = vmatprep.subr.bf16.mxu0 0
        %1255 = vmatpush2.bf16.msra.mxu0 0
        %1256 = vmatprep.subr.bf16.mxu0 0
        %1257 = vmatpush2.bf16.msra.mxu0 0
        %1258 = vmatprep.subr.bf16.mxu0 0
        %1259 = vmatpush2.bf16.msra.mxu0 0
        %1260 = vmatprep.subr.bf16.mxu0 0
        %1261 = vmatpush2.bf16.msra.mxu0 0
        %1262 = vmatprep.subr.bf16.mxu0 0
        %1263 = vmatpush2.bf16.msra.mxu0 0
        %1264 = vmatprep.subr.bf16.mxu0 0
        %1265 = vmatpush2.bf16.msra.mxu0 0
        %1266 = vmatprep.subr.bf16.mxu0 0
        %1267 = vmatpush2.bf16.msra.mxu0 0
        %1268 = vmatprep.mubr.bf16.mxu0 0
        %1269 = vmatmul.mubr.bf16.gmra.mxu0 %v1231
        %v1270 = vpop.f32.mrf.mxu0
        %v1271 = vadd.f32 0.0, %v1270
        %v1272 = vpop.f32.mrf.mxu0
        %v1273 = vpop.f32.mrf.mxu0
        %v1274 = vpop.f32.mrf.mxu0
        %1275 = vdwg.mxu0
        %1277 = vrot.lane.b32.xlu0 %v1051, 8
        %v1278 = vpop.permute.xlu0 %1277
        %1281 = vrot.lane.b32.xlu0 %v1161, 16
        %v1282 = vpop.permute.xlu0 %1281
        %1285 = vrot.lane.b32.xlu0 %v1271, 24
        %v1286 = vpop.permute.xlu0 %1285
        %v1288 = vsel %vm837, %v940, %v1278
        %vm1289 = vcmask 130048
        %v1290 = vsel %vm1289, %v1288, %v1282
        %vm1291 = vcmask 195584
        %v1292 = vsel %vm1291, %v1290, %v1286
        %v1293 = vld [vmem:[%s533] sm:$0xff]
        %v1294 = vld [vmem:[%s533 + $0x8] sm:$0xff]
        %v1295 = vld [vmem:[%s533 + $0x10] sm:$0xff]
        %v1296 = vld [vmem:[%s533 + $0x18] sm:$0xff]
        %v1297 = vpack.c.bf16 %v1292, %v1292
        %v1298 = vpack.c.bf16 %v1294, %v1293
        %v1299 = vpack.c.bf16 %v1296, %v1295
        %v1300 = vld [vmem:[%s603] sm:$0x1]
        %v1301 = vlaneseq
        %v1302 = vshrl.u32 %v1301, 7
        %v1303 = vsub.s32 0, %v1302
        %v1304 = vrot.slane %v1300, %v1303
        %v1306 = vsel %vm787, %v1297, 0
        %1308 = vmatprep.subr.bf16.mxu0 0
        %1309 = vmatpush1.bf16.msra.mxu0 0
        %1310 = vmatprep.subr.bf16.mxu0 0
        %1311 = vmatpush1.bf16.msra.mxu0 0
        %1312 = vmatprep.subr.bf16.mxu0 0
        %1313 = vmatpush1.bf16.msra.mxu0 0
        %1314 = vmatprep.subr.bf16.mxu0 0
        %1315 = vmatpush1.bf16.msra.mxu0 0
        %1316 = vmatprep.subr.bf16.mxu0 0
        %1317 = vmatpush1.bf16.msra.mxu0 0
        %1318 = vmatprep.subr.bf16.mxu0 0
        %1319 = vmatpush1.bf16.msra.mxu0 0
        %1320 = vmatprep.subr.bf16.mxu0 0
        %1321 = vmatpush1.bf16.msra.mxu0 %v1299
        %1322 = vmatprep.subr.bf16.mxu0 0
        %1323 = vmatpush1.bf16.msra.mxu0 %v1298
        %1324 = vmatprep.subr.bf16.mxu0 0
        %1325 = vmatpush2.bf16.msra.mxu0 0
        %1326 = vmatprep.subr.bf16.mxu0 0
        %1327 = vmatpush2.bf16.msra.mxu0 0
        %1328 = vmatprep.subr.bf16.mxu0 0
        %1329 = vmatpush2.bf16.msra.mxu0 0
        %1330 = vmatprep.subr.bf16.mxu0 0
        %1331 = vmatpush2.bf16.msra.mxu0 0
        %1332 = vmatprep.subr.bf16.mxu0 0
        %1333 = vmatpush2.bf16.msra.mxu0 0
        %1334 = vmatprep.subr.bf16.mxu0 0
        %1335 = vmatpush2.bf16.msra.mxu0 0
        %1336 = vmatprep.subr.bf16.mxu0 0
        %1337 = vmatpush2.bf16.msra.mxu0 0
        %1338 = vmatprep.subr.bf16.mxu0 0
        %1339 = vmatpush2.bf16.msra.mxu0 0
        %1340 = vmatprep.mubr.bf16.mxu0 0
        %1341 = vmatmul.mubr.bf16.gmra.mxu0 %v1306
        %v1342 = vpop.f32.mrf.mxu0
        %v1343 = vadd.f32 %v1304, %v1342
        %v1344 = vpop.f32.mrf.mxu0
        %v1345 = vpop.f32.mrf.mxu0
        %v1346 = vpop.f32.mrf.mxu0
        %1347 = vdwg.mxu0
        %v1348 = vadd.f32 %v772, %v1343
        %v1349 = vld [vmem:[%s603 + $0x1] sm:$0x1]
        %v1350 = vld [vmem:[%s603 + $0x2] sm:$0x1]
        %v1351 = vsel %vm787, %v1348, 0.0
        %1352 = vadd.xlane.f32.xlu0 %v1351
        %v1353 = vpop.xlane.xlu0 %1352
        %v1354 = vrcp.pop 32.0
        %v1355 = vmul.f32 %v1353, %v1354
        %v1356 = vsub.f32 %v1348, %v1355
        %v1357 = vmul.f32 %v1356, %v1356
        %v1358 = vsel %vm787, %v1357, 0.0
        %1359 = vadd.xlane.f32.xlu0 %v1358
        %v1360 = vpop.xlane.xlu0 %1359
        %v1361 = vmul.f32 %v1360, %v1354
        %v1362 = vadd.f32 %v1361, 1e-05
        %v1363 = vrsqrt.pop %v1362
        %v1364 = vmul.f32 %v1356, %v1363
        %v1365 = vlaneseq
        %v1366 = vshrl.u32 %v1365, 7
        %v1367 = vsub.s32 0, %v1366
        %v1368 = vrot.slane %v1349, %v1367
        %v1369 = vmul.f32 %v1364, %v1368
        %v1370 = vlaneseq
        %v1371 = vshrl.u32 %v1370, 7
        %v1372 = vsub.s32 0, %v1371
        %v1373 = vrot.slane %v1350, %v1372
        %v1374 = vadd.f32 %v1369, %v1373
        %v1375 = vld [vmem:[%s542] sm:$0xff]
        %v1376 = vld [vmem:[%s542 + $0x8] sm:$0xff]
        %v1377 = vld [vmem:[%s542 + $0x10] sm:$0xff]
        %v1378 = vld [vmem:[%s542 + $0x18] sm:$0xff]
        %v1379 = vpack.c.bf16 %v1374, %v1374
        %v1380 = vpack.c.bf16 %v1376, %v1375
        %v1381 = vpack.c.bf16 %v1378, %v1377
        %v1382 = vld [vmem:[%s603 + $0x3] sm:$0x1]
        %v1383 = vlaneseq
        %v1384 = vshrl.u32 %v1383, 7
        %v1385 = vsub.s32 0, %v1384
        %v1386 = vrot.slane %v1382, %v1385
        %v1388 = vsel %vm787, %v1379, 0
        %1390 = vmatprep.subr.bf16.mxu0 0
        %1391 = vmatpush1.bf16.msra.mxu0 0
        %1392 = vmatprep.subr.bf16.mxu0 0
        %1393 = vmatpush1.bf16.msra.mxu0 0
        %1394 = vmatprep.subr.bf16.mxu0 0
        %1395 = vmatpush1.bf16.msra.mxu0 0
        %1396 = vmatprep.subr.bf16.mxu0 0
        %1397 = vmatpush1.bf16.msra.mxu0 0
        %1398 = vmatprep.subr.bf16.mxu0 0
        %1399 = vmatpush1.bf16.msra.mxu0 0
        %1400 = vmatprep.subr.bf16.mxu0 0
        %1401 = vmatpush1.bf16.msra.mxu0 0
        %1402 = vmatprep.subr.bf16.mxu0 0
        %1403 = vmatpush1.bf16.msra.mxu0 %v1381
        %1404 = vmatprep.subr.bf16.mxu0 0
        %1405 = vmatpush1.bf16.msra.mxu0 %v1380
        %1406 = vmatprep.subr.bf16.mxu0 0
        %1407 = vmatpush2.bf16.msra.mxu0 0
        %1408 = vmatprep.subr.bf16.mxu0 0
        %1409 = vmatpush2.bf16.msra.mxu0 0
        %1410 = vmatprep.subr.bf16.mxu0 0
        %1411 = vmatpush2.bf16.msra.mxu0 0
        %1412 = vmatprep.subr.bf16.mxu0 0
        %1413 = vmatpush2.bf16.msra.mxu0 0
        %1414 = vmatprep.subr.bf16.mxu0 0
        %1415 = vmatpush2.bf16.msra.mxu0 0
        %1416 = vmatprep.subr.bf16.mxu0 0
        %1417 = vmatpush2.bf16.msra.mxu0 0
        %1418 = vmatprep.subr.bf16.mxu0 0
        %1419 = vmatpush2.bf16.msra.mxu0 0
        %1420 = vmatprep.subr.bf16.mxu0 0
        %1421 = vmatpush2.bf16.msra.mxu0 0
        %1422 = vmatprep.mubr.bf16.mxu0 0
        %1423 = vmatmul.mubr.bf16.gmra.mxu0 %v1388
        %v1424 = vpop.f32.mrf.mxu0
        %v1425 = vadd.f32 %v1386, %v1424
        %v1426 = vpop.f32.mrf.mxu0
        %v1427 = vpop.f32.mrf.mxu0
        %v1428 = vpop.f32.mrf.mxu0
        %1429 = vdwg.mxu0
        %v1430 = vmax.f32 %v1425, 0.0
        %s1431 = scalar_lea.vmem %s542, 32 [#allocation14]
        %v1432 = vld [vmem:[%s1431] sm:$0xff]
        %v1433 = vld [vmem:[%s1431 + $0x8] sm:$0xff]
        %v1434 = vld [vmem:[%s1431 + $0x10] sm:$0xff]
        %v1435 = vld [vmem:[%s1431 + $0x18] sm:$0xff]
        %v1436 = vpack.c.bf16 %v1430, %v1430
        %v1437 = vpack.c.bf16 %v1433, %v1432
        %v1438 = vpack.c.bf16 %v1435, %v1434
        %v1439 = vld [vmem:[%s603 + $0x4] sm:$0x1]
        %v1440 = vlaneseq
        %v1441 = vshrl.u32 %v1440, 7
        %v1442 = vsub.s32 0, %v1441
        %v1443 = vrot.slane %v1439, %v1442
        %v1445 = vsel %vm787, %v1436, 0
        %1447 = vmatprep.subr.bf16.mxu0 0
        %1448 = vmatpush1.bf16.msra.mxu0 0
        %1449 = vmatprep.subr.bf16.mxu0 0
        %1450 = vmatpush1.bf16.msra.mxu0 0
        %1451 = vmatprep.subr.bf16.mxu0 0
        %1452 = vmatpush1.bf16.msra.mxu0 0
        %1453 = vmatprep.subr.bf16.mxu0 0
        %1454 = vmatpush1.bf16.msra.mxu0 0
        %1455 = vmatprep.subr.bf16.mxu0 0
        %1456 = vmatpush1.bf16.msra.mxu0 0
        %1457 = vmatprep.subr.bf16.mxu0 0
        %1458 = vmatpush1.bf16.msra.mxu0 0
        %1459 = vmatprep.subr.bf16.mxu0 0
        %1460 = vmatpush1.bf16.msra.mxu0 %v1438
        %1461 = vmatprep.subr.bf16.mxu0 0
        %1462 = vmatpush1.bf16.msra.mxu0 %v1437
        %1463 = vmatprep.subr.bf16.mxu0 0
        %1464 = vmatpush2.bf16.msra.mxu0 0
        %1465 = vmatprep.subr.bf16.mxu0 0
        %1466 = vmatpush2.bf16.msra.mxu0 0
        %1467 = vmatprep.subr.bf16.mxu0 0
        %1468 = vmatpush2.bf16.msra.mxu0 0
        %1469 = vmatprep.subr.bf16.mxu0 0
        %1470 = vmatpush2.bf16.msra.mxu0 0
        %1471 = vmatprep.subr.bf16.mxu0 0
        %1472 = vmatpush2.bf16.msra.mxu0 0
        %1473 = vmatprep.subr.bf16.mxu0 0
        %1474 = vmatpush2.bf16.msra.mxu0 0
        %1475 = vmatprep.subr.bf16.mxu0 0
        %1476 = vmatpush2.bf16.msra.mxu0 0
        %1477 = vmatprep.subr.bf16.mxu0 0
        %1478 = vmatpush2.bf16.msra.mxu0 0
        %1479 = vmatprep.mubr.bf16.mxu0 0
        %1480 = vmatmul.mubr.bf16.gmra.mxu0 %v1445
        %v1481 = vpop.f32.mrf.mxu0
        %v1482 = vadd.f32 %v1443, %v1481
        %v1483 = vpop.f32.mrf.mxu0
        %v1484 = vpop.f32.mrf.mxu0
        %v1485 = vpop.f32.mrf.mxu0
        %1486 = vdwg.mxu0
        %v1487 = vadd.f32 %v1374, %v1482
        %v1488 = vld [vmem:[%s603 + $0x5] sm:$0x1]
        %v1489 = vld [vmem:[%s603 + $0x6] sm:$0x1]
        %v1490 = vsel %vm787, %v1487, 0.0
        %1491 = vadd.xlane.f32.xlu0 %v1490
        %v1492 = vpop.xlane.xlu0 %1491
        %v1493 = vmul.f32 %v1492, %v1354
        %v1494 = vsub.f32 %v1487, %v1493
        %v1495 = vmul.f32 %v1494, %v1494
        %v1496 = vsel %vm787, %v1495, 0.0
        %1497 = vadd.xlane.f32.xlu0 %v1496
        %v1498 = vpop.xlane.xlu0 %1497
        %v1499 = vmul.f32 %v1498, %v1354
        %v1500 = vadd.f32 %v1499, 1e-05
        %v1501 = vrsqrt.pop %v1500
        %v1502 = vmul.f32 %v1494, %v1501
        %v1503 = vlaneseq
        %v1504 = vshrl.u32 %v1503, 7
        %v1505 = vsub.s32 0, %v1504
        %v1506 = vrot.slane %v1488, %v1505
        %v1507 = vmul.f32 %v1502, %v1506
        %v1508 = vlaneseq
        %v1509 = vshrl.u32 %v1508, 7
        %v1510 = vsub.s32 0, %v1509
        %v1511 = vrot.slane %v1489, %v1510
        %v1512 = vadd.f32 %v1507, %v1511
        %1513 = vst.msk [vmem:[#allocation2] sm:$0xff] %vm787, %v1512
        %p1514 = scmp.eq.s32.totalorder %s27, 1
        // Predicated region
        $region109: #{tpu_custom_call.1} parent=67 // pred_check
          %p1515 = pneg %p1514
        $region110: #{tpu_custom_call.1} parent=67 // pred_check_branch
          %1517 = sbr.rel (%p1515) target = $region112
        $region111: #{tpu_custom_call.1} parent=67 // pred_region
          %v1518 = vld [vmem:[#allocation15] sm:$0xff]
          %v1519 = vld [vmem:[#allocation15 + $0x8] sm:$0xff]
          %v1520 = vld [vmem:[#allocation15 + $0x10] sm:$0xff]
          %v1521 = vld [vmem:[#allocation15 + $0x18] sm:$0xff]
          %v1522 = vpack.c.bf16 %v1512, %v1512
          %v1523 = vpack.c.bf16 %v1519, %v1518
          %v1524 = vpack.c.bf16 %v1521, %v1520
          %v1525 = vld [vmem:[%s11] sm:$0x1]
          %v1527 = vlaneseq
          %v1528 = vshrl.u32 %v1527, 7
          %v1529 = vsub.s32 0, %v1528
          %v1530 = vrot.slane %v1525, %v1529
          %v1533 = vsel %vm787, %v1522, 0
          %1535 = vmatprep.subr.bf16.mxu0 0
          %1536 = vmatpush1.bf16.msra.mxu0 0
          %1537 = vmatprep.subr.bf16.mxu0 0
          %1538 = vmatpush1.bf16.msra.mxu0 0
          %1539 = vmatprep.subr.bf16.mxu0 0
          %1540 = vmatpush1.bf16.msra.mxu0 0
          %1541 = vmatprep.subr.bf16.mxu0 0
          %1542 = vmatpush1.bf16.msra.mxu0 0
          %1543 = vmatprep.subr.bf16.mxu0 0
          %1544 = vmatpush1.bf16.msra.mxu0 0
          %1545 = vmatprep.subr.bf16.mxu0 0
          %1546 = vmatpush1.bf16.msra.mxu0 0
          %1547 = vmatprep.subr.bf16.mxu0 0
          %1548 = vmatpush1.bf16.msra.mxu0 %v1524
          %1549 = vmatprep.subr.bf16.mxu0 0
          %1550 = vmatpush1.bf16.msra.mxu0 %v1523
          %1551 = vmatprep.subr.bf16.mxu0 0
          %1552 = vmatpush2.bf16.msra.mxu0 0
          %1553 = vmatprep.subr.bf16.mxu0 0
          %1554 = vmatpush2.bf16.msra.mxu0 0
          %1555 = vmatprep.subr.bf16.mxu0 0
          %1556 = vmatpush2.bf16.msra.mxu0 0
          %1557 = vmatprep.subr.bf16.mxu0 0
          %1558 = vmatpush2.bf16.msra.mxu0 0
          %1559 = vmatprep.subr.bf16.mxu0 0
          %1560 = vmatpush2.bf16.msra.mxu0 0
          %1561 = vmatprep.subr.bf16.mxu0 0
          %1562 = vmatpush2.bf16.msra.mxu0 0
          %1563 = vmatprep.subr.bf16.mxu0 0
          %1564 = vmatpush2.bf16.msra.mxu0 0
          %1565 = vmatprep.subr.bf16.mxu0 0
          %1566 = vmatpush2.bf16.msra.mxu0 0
          %1567 = vmatprep.mubr.bf16.mxu0 0
          %1568 = vmatmul.mubr.bf16.gmra.mxu0 %v1533
          %v1569 = vpop.f32.mrf.mxu0
          %v1570 = vadd.f32 %v1530, %v1569
          %v1571 = vpop.f32.mrf.mxu0
          %v1572 = vpop.f32.mrf.mxu0
          %v1573 = vpop.f32.mrf.mxu0
          %1574 = vdwg.mxu0
          %1575 = vst [vmem:[#allocation16] sm:$0xff] %v1570
        $region112: #{tpu_custom_call.1} parent=67 // pred_fallthru
          _
        // Predicated region
        $region113: #{tpu_custom_call.1} parent=67 // pred_check
          %p1576 = pneg %p317
        $region114: #{tpu_custom_call.1} parent=67 // pred_check_branch
          %1578 = sbr.rel (%p1576) target = $region116
        $region115: #{tpu_custom_call.1} parent=67 // pred_region
          %s1580 = ssub.s32 128, 128
          %1581 = vsyncadd [#allocation5], %s1580
          %s1583 = sshll.u32 [#allocation16], 4
          %s1584 = int_to_ptr.vmem [resolvable:$true] %s1583
          %1586 = dma.vmem_to_hbm [thread:$0]  %s1584, 128, %s12, [#allocation5]
        $region116: #{tpu_custom_call.1} parent=67 // pred_fallthru
          _
        // Predicated region
        $region117: #{tpu_custom_call.1} parent=67 // pred_check
          %p1587 = pneg %p317
        $region118: #{tpu_custom_call.1} parent=67 // pred_check_branch
          %1589 = sbr.rel (%p1587) target = $region120
        $region119: #{tpu_custom_call.1} parent=67 // pred_region
          %1590 = dma.done [#allocation5], 128
        $region120: #{tpu_custom_call.1} parent=67 // pred_fallthru
          _
      $region68: #{tpu_custom_call.1} parent=5 // pred_fallthru
        _
      %p1591 = scmp.le.s32.totalorder 2, %s22
      // Predicated region
      $region121: #{tpu_custom_call.1} parent=5 // pred_check
        %p1592 = pneg %p1591
      $region122: #{tpu_custom_call.1} parent=5 // pred_check_branch
        %1594 = sbr.rel (%p1592) target = $region124
      $region123: #{tpu_custom_call.1} parent=5 // pred_region
        %s1595 = ssub.s32 %s22, 2
      $region124: #{tpu_custom_call.1} parent=5 // pred_fallthru
        _
    $region6: #{tpu_custom_call.1} parent=1 // loop_footer
      %s26 = sadd.s32 1, %s22
    $region7: #{tpu_custom_call.1} parent=1 // loop_footer_branch
      %21 = sbr.rel target = $region3
    $region8: #{tpu_custom_call.1} parent=1 // loop_exit
      _
    %1596 = vsyncpa [#allocation4], 1
    %s1597 = scalar_lea.sflag [#allocation4], 1
    %1598 = vsyncpa %s1597, 1
    %1599 = vsyncpa [#allocation7], 1
    %1600 = vsyncpa [#allocation10], 1
    %1601 = vsyncpa [#allocation5], 1
    %s1602 = scalar_lea.sflag [#allocation5], 1
    %1603 = vsyncpa %s1602, 1

</llo_original>
